<compile_context>
chip_gen: v7x
topology: tpu7x:2x2x1
jax: 0.10.0
libtpu: 0.0.40
codegen_flags: <defaults>
</compile_context>

<pallas_src>
import jax
import jax.numpy as jnp
from jax.experimental import pallas as pl
from jax.experimental.pallas import tpu as pltpu


def rnn_encoder_kernel(x2_ref, w0_ref, b0_ref, wbig_ref, bbig_ref,
                       out_ref, hn_ref):
    T, B, S = out_ref.shape
    f32 = jnp.float32
    bf16 = jnp.bfloat16

    # ---- one packed f32 matmul for all of layer-0's input projections --------
    # (embedding Linear already folded into w0/b0 in the wrapper; off the
    #  serial recurrent chain, so kept in f32 for accuracy)
    gi0 = jnp.dot(x2_ref[...], w0_ref[...],
                  preferred_element_type=f32) + b0_ref[...]        # (T*B, 3S)

    def l0_gates(gi, gh, h):
        # gi/gh packed r|z|n along lanes; one sigmoid pass over the r|z lanes.
        rz = jax.nn.sigmoid(gi[:, 0:2 * S] + gh[:, 0:2 * S])
        n = jnp.tanh(gi[:, 2 * S:3 * S] + rz[:, 0:S] * gh[:, 2 * S:3 * S])
        return n + rz[:, S:2 * S] * (h - n)          # == (1-z)*n + z*h

    def l1_gates(g, h):
        # g columns: [ (gi+gh) r|z (2S) | gi_n (S) | gh_n (S) ], biases included.
        rz = jax.nn.sigmoid(g[:, 0:2 * S])
        n = jnp.tanh(g[:, 2 * S:3 * S] + rz[:, 0:S] * g[:, 3 * S:4 * S])
        return n + rz[:, S:2 * S] * (h - n)

    # ---- prologue: layer-0 step 0 (h == 0 -> gh == bhh0, no matmul needed) ---
    h0 = l0_gates(gi0[0:B], bbig_ref[0:1, 4 * S:7 * S], jnp.zeros((B, S), f32))
    h1 = jnp.zeros((B, S), f32)

    # ---- fused wavefront: one bf16 matmul per step does layer-0 gh[t] and the
    #      entire layer-1 step t-1 (block-diagonal packed RHS) -----------------
    for t in range(1, T):                      # fully unrolled (T static, small)
        lhs = jnp.concatenate([h0, h1], axis=-1).astype(bf16)      # (B, 2S)
        g = jnp.dot(lhs, wbig_ref[...],
                    preferred_element_type=f32) + bbig_ref[...]    # (B, 8S)
        h1 = l1_gates(g[:, 0:4 * S], h1)       # layer 1, step t-1 (input = h0)
        out_ref[t - 1] = h1
        h0 = l0_gates(gi0[t * B:(t + 1) * B], g[:, 4 * S:7 * S], h0)  # layer 0, t

    # ---- epilogue: layer-1 step T-1 (layer-1 columns of the packed RHS only) -
    lhs = jnp.concatenate([h0, h1], axis=-1).astype(bf16)
    g1 = (jnp.dot(lhs, wbig_ref[:, 0:4 * S], preferred_element_type=f32)
          + bbig_ref[:, 0:4 * S])
    h1 = l1_gates(g1, h1)
    out_ref[T - 1] = h1

    hn_ref[0] = h0                             # PyTorch order: layer 0 then 1
    hn_ref[1] = h1


def _prepare_weights(p, S):
    """Fold the embed Linear into layer-0's packed input projection and build the
    block-diagonal per-step RHS (bf16) + packed bias row (f32)."""
    f32 = jnp.float32

    # Layer-0 input projection with the embedding folded in (exact in f32).
    w0 = (p["we_T"] @ p["wih0_T"]).astype(f32)                      # (16, 3S)
    b0 = (p["be"] @ p["wih0_T"] + p["bih0"]).astype(f32)            # (1, 3S)

    wih1, whh1, whh0 = p["wih1_T"], p["whh1_T"], p["whh0_T"]
    z_ss = jnp.zeros((S, S), f32)
    z_s3s = jnp.zeros((S, 3 * S), f32)
    # Column layout (8S = 256 lanes):
    #   0:2S   layer-1 r|z, gi+gh fused (contracts against [h0 | h1])
    #   2S:3S  layer-1 gi_n  (contracts against h0 only)
    #   3S:4S  layer-1 gh_n  (contracts against h1 only)
    #   4S:7S  layer-0 recurrent gh r|z|n (contracts against h0 only)
    #   7S:8S  zero pad so both result blocks sit on 128-lane vreg boundaries
    top = jnp.concatenate(
        [wih1[:, 0:2 * S], wih1[:, 2 * S:3 * S], z_ss, whh0, z_ss], axis=1)
    bot = jnp.concatenate(
        [whh1[:, 0:2 * S], z_ss, whh1[:, 2 * S:3 * S], z_s3s, z_ss], axis=1)
    wbig = jnp.concatenate([top, bot], axis=0).astype(jnp.bfloat16)  # (2S, 8S)

    bih1, bhh1, bhh0 = p["bih1"], p["bhh1"], p["bhh0"]
    bbig = jnp.concatenate(
        [bih1[:, 0:2 * S] + bhh1[:, 0:2 * S],     # layer-1 r|z (gi+gh biases)
         bih1[:, 2 * S:3 * S],                    # layer-1 gi_n bias
         bhh1[:, 2 * S:3 * S],                    # layer-1 gh_n bias
         bhh0,                                    # layer-0 gh bias (packed r|z|n)
         jnp.zeros((1, S), f32)], axis=1)                            # (1, 8S)
    return w0, b0, wbig, bbig


def rnn_encoder_forward(x, params):
    T, B, F = x.shape
    S = params["we_T"].shape[1]
    w0, b0, wbig, bbig = _prepare_weights(params, S)
    x2 = x.reshape(T * B, F)                     # 2-D input, packed in wrapper

    vmem = pl.BlockSpec(memory_space=pltpu.MemorySpace.VMEM)
    args = (x2, w0, b0, wbig, bbig)

    outputs, state = pl.pallas_call(
        rnn_encoder_kernel,
        out_shape=(jax.ShapeDtypeStruct((T, B, S), jnp.float32),
                   jax.ShapeDtypeStruct((2, B, S), jnp.float32)),
        in_specs=[vmem] * len(args),
        out_specs=(vmem, vmem),
        compiler_params=pltpu.CompilerParams(vmem_limit_bytes=32 * 1024 * 1024),
    )(*args)
    return outputs, state


def init_params(key, size):
    """Deterministic init mimicking PyTorch shapes (weights stored pre-transposed)."""
    ks = jax.random.split(key, 10)

    def u(k, shape, fan):
        bound = 1.0 / jnp.sqrt(fan)
        return jax.random.uniform(k, shape, jnp.float32, -bound, bound)

    S = size
    p = {}
    # nn.Linear(16, S): weight (S,16), bias (S,) -> stored transposed (16,S), (1,S)
    p["we_T"] = u(ks[0], (16, S), 16)
    p["be"] = u(ks[1], (1, S), 16)
    # GRU layer 0: weight_ih (3S,S), weight_hh (3S,S), biases (3S,) -> transposed
    p["wih0_T"] = u(ks[2], (S, 3 * S), S)
    p["whh0_T"] = u(ks[3], (S, 3 * S), S)
    p["bih0"] = u(ks[4], (1, 3 * S), S)
    p["bhh0"] = u(ks[5], (1, 3 * S), S)
    # GRU layer 1
    p["wih1_T"] = u(ks[6], (S, 3 * S), S)
    p["whh1_T"] = u(ks[7], (S, 3 * S), S)
    p["bih1"] = u(ks[8], (1, 3 * S), S)
    p["bhh1"] = u(ks[9], (1, 3 * S), S)
    return p


def reference_forward(x, p):
    """Pure-JAX f32 reference reproducing PyTorch Linear + 2-layer GRU (eval mode)."""
    T, B, F = x.shape
    S = p["we_T"].shape[1]
    cur = (x.reshape(T * B, F) @ p["we_T"] + p["be"]).reshape(T, B, S)
    hns = []
    for l in range(2):
        wihT, whhT = p[f"wih{l}_T"], p[f"whh{l}_T"]
        bih, bhh = p[f"bih{l}"], p[f"bhh{l}"]
        h = jnp.zeros((B, S), jnp.float32)
        outs = []
        for t in range(T):
            gi = cur[t] @ wihT + bih
            gh = h @ whhT + bhh
            r = jax.nn.sigmoid(gi[:, :S] + gh[:, :S])
            z = jax.nn.sigmoid(gi[:, S:2 * S] + gh[:, S:2 * S])
            n = jnp.tanh(gi[:, 2 * S:] + r * gh[:, 2 * S:])
            h = (1.0 - z) * n + z * h
            outs.append(h)
        cur = jnp.stack(outs, 0)
        hns.append(h)
    return cur, jnp.stack(hns, 0)


if __name__ == "__main__":
    T, B, F, S = 8, 2, 16, 32   # seq=8, batch=2, input feat=16, model_size=32

    key = jax.random.PRNGKey(0)
    kx, kp = jax.random.split(key)
    x = jax.random.normal(kx, (T, B, F), jnp.float32)
    params = init_params(kp, S)

    outputs, state = rnn_encoder_forward(x, params)
    outputs, state = jax.block_until_ready((outputs, state))

    ref_out, ref_state = reference_forward(x, params)
    assert outputs.shape == (T, B, S) and state.shape == (2, B, S)
    # Tolerance loosened because the recurrent-chain matmuls use bf16 MXU
    # operands (f32 accumulation + f32 gate math); the reference is exact f32.
    assert jnp.allclose(outputs, ref_out, atol=5e-2, rtol=5e-2)
    assert jnp.allclose(state, ref_state, atol=5e-2, rtol=5e-2)

    print("KERNEL_OK")
</pallas_src>

<mosaic_0001>
module attributes {stable_mosaic.version = 11 : i64} {
  func.func @rnn_encoder_kernel(%arg0: memref<16x16xf32, #tpu.memory_space<vmem>>, %arg1: memref<16x96xf32, #tpu.memory_space<vmem>>, %arg2: memref<1x96xf32, #tpu.memory_space<vmem>>, %arg3: memref<64x256xbf16, #tpu.memory_space<vmem>>, %arg4: memref<1x256xf32, #tpu.memory_space<vmem>>, %arg5: memref<8x2x32xf32, #tpu.memory_space<vmem>>, %arg6: memref<2x2x32xf32, #tpu.memory_space<vmem>>) attributes {dimension_semantics = [], scalar_prefetch = 0 : i64, scratch_operands = 0 : i64, tpu.core_type = #tpu.core_type<tc>} {
    %c0 = arith.constant 0 : index
    %c0_0 = arith.constant 0 : index
    %0 = vector.load %arg0[%c0, %c0_0] : memref<16x16xf32, #tpu.memory_space<vmem>>, vector<16x16xf32>
    %c0_1 = arith.constant 0 : index
    %c0_2 = arith.constant 0 : index
    %1 = vector.load %arg1[%c0_1, %c0_2] : memref<16x96xf32, #tpu.memory_space<vmem>>, vector<16x96xf32>
    %cst = arith.constant dense<0.000000e+00> : vector<16x96xf32>
    %2 = tpu.matmul %0, %1, %cst {dimension_numbers = #tpu.dot_dimension_numbers<[1], [0], [0], [1], [0, 0, 1, 1], [], []>} : vector<16x16xf32>, vector<16x96xf32>, vector<16x96xf32> -> vector<16x96xf32>
    %c0_3 = arith.constant 0 : index
    %c0_4 = arith.constant 0 : index
    %3 = vector.load %arg2[%c0_3, %c0_4] : memref<1x96xf32, #tpu.memory_space<vmem>>, vector<1x96xf32>
    %4 = vector.broadcast %3 : vector<1x96xf32> to vector<16x96xf32>
    %5 = arith.addf %2, %4 : vector<16x96xf32>
    %6 = vector.extract_strided_slice %5 {offsets = [0, 0], sizes = [2, 96], strides = [1, 1]} : vector<16x96xf32> to vector<2x96xf32>
    %c0_5 = arith.constant 0 : index
    %c128 = arith.constant 128 : index
    %7 = vector.load %arg4[%c0_5, %c128] : memref<1x256xf32, #tpu.memory_space<vmem>>, vector<1x96xf32>
    %cst_6 = arith.constant 0.000000e+00 : f32
    %8 = vector.broadcast %cst_6 : f32 to vector<2x32xf32>
    %9 = vector.extract_strided_slice %6 {offsets = [0, 0], sizes = [2, 64], strides = [1, 1]} : vector<2x96xf32> to vector<2x64xf32>
    %10 = vector.extract_strided_slice %7 {offsets = [0, 0], sizes = [1, 64], strides = [1, 1]} : vector<1x96xf32> to vector<1x64xf32>
    %11 = vector.broadcast %10 : vector<1x64xf32> to vector<2x64xf32>
    %12 = arith.addf %9, %11 : vector<2x64xf32>
    %13 = arith.negf %12 : vector<2x64xf32>
    %14 = math.exp %13 : vector<2x64xf32>
    %cst_7 = arith.constant 1.000000e+00 : f32
    %15 = vector.broadcast %cst_7 : f32 to vector<2x64xf32>
    %16 = arith.addf %15, %14 : vector<2x64xf32>
    %17 = arith.divf %15, %16 : vector<2x64xf32>
    %18 = vector.extract_strided_slice %6 {offsets = [0, 64], sizes = [2, 32], strides = [1, 1]} : vector<2x96xf32> to vector<2x32xf32>
    %19 = vector.extract_strided_slice %17 {offsets = [0, 0], sizes = [2, 32], strides = [1, 1]} : vector<2x64xf32> to vector<2x32xf32>
    %20 = vector.extract_strided_slice %7 {offsets = [0, 64], sizes = [1, 32], strides = [1, 1]} : vector<1x96xf32> to vector<1x32xf32>
    %21 = vector.broadcast %20 : vector<1x32xf32> to vector<2x32xf32>
    %22 = arith.mulf %19, %21 : vector<2x32xf32>
    %23 = arith.addf %18, %22 : vector<2x32xf32>
    %24 = math.tanh %23 : vector<2x32xf32>
    %25 = vector.extract_strided_slice %17 {offsets = [0, 32], sizes = [2, 32], strides = [1, 1]} : vector<2x64xf32> to vector<2x32xf32>
    %26 = arith.subf %8, %24 : vector<2x32xf32>
    %27 = arith.mulf %25, %26 : vector<2x32xf32>
    %28 = arith.addf %24, %27 : vector<2x32xf32>
    %cst_8 = arith.constant 0.000000e+00 : f32
    %29 = vector.broadcast %cst_8 : f32 to vector<2x32xf32>
    %30 = tpu.concatenate %28, %29 in 1 : vector<2x32xf32>, vector<2x32xf32> -> vector<2x64xf32>
    %31 = arith.truncf %30 : vector<2x64xf32> to vector<2x64xbf16>
    %c0_9 = arith.constant 0 : index
    %c0_10 = arith.constant 0 : index
    %32 = vector.load %arg3[%c0_9, %c0_10] : memref<64x256xbf16, #tpu.memory_space<vmem>>, vector<64x256xbf16>
    %cst_11 = arith.constant dense<0.000000e+00> : vector<2x256xf32>
    %33 = tpu.matmul %31, %32, %cst_11 {dimension_numbers = #tpu.dot_dimension_numbers<[1], [0], [0], [1], [0, 0, 1, 1], [], []>} : vector<2x64xbf16>, vector<64x256xbf16>, vector<2x256xf32> -> vector<2x256xf32>
    %c0_12 = arith.constant 0 : index
    %c0_13 = arith.constant 0 : index
    %34 = vector.load %arg4[%c0_12, %c0_13] : memref<1x256xf32, #tpu.memory_space<vmem>>, vector<1x256xf32>
    %35 = vector.broadcast %34 : vector<1x256xf32> to vector<2x256xf32>
    %36 = arith.addf %33, %35 : vector<2x256xf32>
    %37 = vector.extract_strided_slice %36 {offsets = [0, 0], sizes = [2, 128], strides = [1, 1]} : vector<2x256xf32> to vector<2x128xf32>
    %38 = vector.extract_strided_slice %37 {offsets = [0, 0], sizes = [2, 64], strides = [1, 1]} : vector<2x128xf32> to vector<2x64xf32>
    %39 = arith.negf %38 : vector<2x64xf32>
    %40 = math.exp %39 : vector<2x64xf32>
    %cst_14 = arith.constant 1.000000e+00 : f32
    %41 = vector.broadcast %cst_14 : f32 to vector<2x64xf32>
    %42 = arith.addf %41, %40 : vector<2x64xf32>
    %43 = arith.divf %41, %42 : vector<2x64xf32>
    %44 = vector.extract_strided_slice %37 {offsets = [0, 64], sizes = [2, 32], strides = [1, 1]} : vector<2x128xf32> to vector<2x32xf32>
    %45 = vector.extract_strided_slice %43 {offsets = [0, 0], sizes = [2, 32], strides = [1, 1]} : vector<2x64xf32> to vector<2x32xf32>
    %46 = vector.extract_strided_slice %37 {offsets = [0, 96], sizes = [2, 32], strides = [1, 1]} : vector<2x128xf32> to vector<2x32xf32>
    %47 = arith.mulf %45, %46 : vector<2x32xf32>
    %48 = arith.addf %44, %47 : vector<2x32xf32>
    %49 = math.tanh %48 : vector<2x32xf32>
    %50 = vector.extract_strided_slice %43 {offsets = [0, 32], sizes = [2, 32], strides = [1, 1]} : vector<2x64xf32> to vector<2x32xf32>
    %51 = arith.subf %29, %49 : vector<2x32xf32>
    %52 = arith.mulf %50, %51 : vector<2x32xf32>
    %53 = arith.addf %49, %52 : vector<2x32xf32>
    %c0_15 = arith.constant 0 : index
    %c0_16 = arith.constant 0 : index
    %c0_17 = arith.constant 0 : index
    %54 = vector.load %arg5[%c0_15, %c0_16, %c0_17] : memref<8x2x32xf32, #tpu.memory_space<vmem>>, vector<1x2x32xf32>
    %55 = vector.shape_cast %54 : vector<1x2x32xf32> to vector<2x32xf32>
    %56 = vector.shape_cast %53 : vector<2x32xf32> to vector<1x2x32xf32>
    tpu.vector_store %arg5[%c0_15, %c0_16, %c0_17], %56 {strides = array<i32>} : memref<8x2x32xf32, #tpu.memory_space<vmem>>, vector<1x2x32xf32>,
    %57 = vector.extract_strided_slice %5 {offsets = [2, 0], sizes = [2, 96], strides = [1, 1]} : vector<16x96xf32> to vector<2x96xf32>
    %58 = vector.extract_strided_slice %36 {offsets = [0, 128], sizes = [2, 96], strides = [1, 1]} : vector<2x256xf32> to vector<2x96xf32>
    %59 = vector.extract_strided_slice %57 {offsets = [0, 0], sizes = [2, 64], strides = [1, 1]} : vector<2x96xf32> to vector<2x64xf32>
    %60 = vector.extract_strided_slice %58 {offsets = [0, 0], sizes = [2, 64], strides = [1, 1]} : vector<2x96xf32> to vector<2x64xf32>
    %61 = arith.addf %59, %60 : vector<2x64xf32>
    %62 = arith.negf %61 : vector<2x64xf32>
    %63 = math.exp %62 : vector<2x64xf32>
    %cst_18 = arith.constant 1.000000e+00 : f32
    %64 = vector.broadcast %cst_18 : f32 to vector<2x64xf32>
    %65 = arith.addf %64, %63 : vector<2x64xf32>
    %66 = arith.divf %64, %65 : vector<2x64xf32>
    %67 = vector.extract_strided_slice %57 {offsets = [0, 64], sizes = [2, 32], strides = [1, 1]} : vector<2x96xf32> to vector<2x32xf32>
    %68 = vector.extract_strided_slice %66 {offsets = [0, 0], sizes = [2, 32], strides = [1, 1]} : vector<2x64xf32> to vector<2x32xf32>
    %69 = vector.extract_strided_slice %58 {offsets = [0, 64], sizes = [2, 32], strides = [1, 1]} : vector<2x96xf32> to vector<2x32xf32>
    %70 = arith.mulf %68, %69 : vector<2x32xf32>
    %71 = arith.addf %67, %70 : vector<2x32xf32>
    %72 = math.tanh %71 : vector<2x32xf32>
    %73 = vector.extract_strided_slice %66 {offsets = [0, 32], sizes = [2, 32], strides = [1, 1]} : vector<2x64xf32> to vector<2x32xf32>
    %74 = arith.subf %28, %72 : vector<2x32xf32>
    %75 = arith.mulf %73, %74 : vector<2x32xf32>
    %76 = arith.addf %72, %75 : vector<2x32xf32>
    %77 = tpu.concatenate %76, %53 in 1 : vector<2x32xf32>, vector<2x32xf32> -> vector<2x64xf32>
    %78 = arith.truncf %77 : vector<2x64xf32> to vector<2x64xbf16>
    %c0_19 = arith.constant 0 : index
    %c0_20 = arith.constant 0 : index
    %79 = vector.load %arg3[%c0_19, %c0_20] : memref<64x256xbf16, #tpu.memory_space<vmem>>, vector<64x256xbf16>
    %cst_21 = arith.constant dense<0.000000e+00> : vector<2x256xf32>
    %80 = tpu.matmul %78, %79, %cst_21 {dimension_numbers = #tpu.dot_dimension_numbers<[1], [0], [0], [1], [0, 0, 1, 1], [], []>} : vector<2x64xbf16>, vector<64x256xbf16>, vector<2x256xf32> -> vector<2x256xf32>
    %c0_22 = arith.constant 0 : index
    %c0_23 = arith.constant 0 : index
    %81 = vector.load %arg4[%c0_22, %c0_23] : memref<1x256xf32, #tpu.memory_space<vmem>>, vector<1x256xf32>
    %82 = vector.broadcast %81 : vector<1x256xf32> to vector<2x256xf32>
    %83 = arith.addf %80, %82 : vector<2x256xf32>
    %84 = vector.extract_strided_slice %83 {offsets = [0, 0], sizes = [2, 128], strides = [1, 1]} : vector<2x256xf32> to vector<2x128xf32>
    %85 = vector.extract_strided_slice %84 {offsets = [0, 0], sizes = [2, 64], strides = [1, 1]} : vector<2x128xf32> to vector<2x64xf32>
    %86 = arith.negf %85 : vector<2x64xf32>
    %87 = math.exp %86 : vector<2x64xf32>
    %cst_24 = arith.constant 1.000000e+00 : f32
    %88 = vector.broadcast %cst_24 : f32 to vector<2x64xf32>
    %89 = arith.addf %88, %87 : vector<2x64xf32>
    %90 = arith.divf %88, %89 : vector<2x64xf32>
    %91 = vector.extract_strided_slice %84 {offsets = [0, 64], sizes = [2, 32], strides = [1, 1]} : vector<2x128xf32> to vector<2x32xf32>
    %92 = vector.extract_strided_slice %90 {offsets = [0, 0], sizes = [2, 32], strides = [1, 1]} : vector<2x64xf32> to vector<2x32xf32>
    %93 = vector.extract_strided_slice %84 {offsets = [0, 96], sizes = [2, 32], strides = [1, 1]} : vector<2x128xf32> to vector<2x32xf32>
    %94 = arith.mulf %92, %93 : vector<2x32xf32>
    %95 = arith.addf %91, %94 : vector<2x32xf32>
    %96 = math.tanh %95 : vector<2x32xf32>
    %97 = vector.extract_strided_slice %90 {offsets = [0, 32], sizes = [2, 32], strides = [1, 1]} : vector<2x64xf32> to vector<2x32xf32>
    %98 = arith.subf %53, %96 : vector<2x32xf32>
    %99 = arith.mulf %97, %98 : vector<2x32xf32>
    %100 = arith.addf %96, %99 : vector<2x32xf32>
    %c1 = arith.constant 1 : index
    %c0_25 = arith.constant 0 : index
    %c0_26 = arith.constant 0 : index
    %101 = vector.load %arg5[%c1, %c0_25, %c0_26] : memref<8x2x32xf32, #tpu.memory_space<vmem>>, vector<1x2x32xf32>
    %102 = vector.shape_cast %101 : vector<1x2x32xf32> to vector<2x32xf32>
    %103 = vector.shape_cast %100 : vector<2x32xf32> to vector<1x2x32xf32>
    tpu.vector_store %arg5[%c1, %c0_25, %c0_26], %103 {strides = array<i32>} : memref<8x2x32xf32, #tpu.memory_space<vmem>>, vector<1x2x32xf32>,
    %104 = vector.extract_strided_slice %5 {offsets = [4, 0], sizes = [2, 96], strides = [1, 1]} : vector<16x96xf32> to vector<2x96xf32>
    %105 = vector.extract_strided_slice %83 {offsets = [0, 128], sizes = [2, 96], strides = [1, 1]} : vector<2x256xf32> to vector<2x96xf32>
    %106 = vector.extract_strided_slice %104 {offsets = [0, 0], sizes = [2, 64], strides = [1, 1]} : vector<2x96xf32> to vector<2x64xf32>
    %107 = vector.extract_strided_slice %105 {offsets = [0, 0], sizes = [2, 64], strides = [1, 1]} : vector<2x96xf32> to vector<2x64xf32>
    %108 = arith.addf %106, %107 : vector<2x64xf32>
    %109 = arith.negf %108 : vector<2x64xf32>
    %110 = math.exp %109 : vector<2x64xf32>
    %cst_27 = arith.constant 1.000000e+00 : f32
    %111 = vector.broadcast %cst_27 : f32 to vector<2x64xf32>
    %112 = arith.addf %111, %110 : vector<2x64xf32>
    %113 = arith.divf %111, %112 : vector<2x64xf32>
    %114 = vector.extract_strided_slice %104 {offsets = [0, 64], sizes = [2, 32], strides = [1, 1]} : vector<2x96xf32> to vector<2x32xf32>
    %115 = vector.extract_strided_slice %113 {offsets = [0, 0], sizes = [2, 32], strides = [1, 1]} : vector<2x64xf32> to vector<2x32xf32>
    %116 = vector.extract_strided_slice %105 {offsets = [0, 64], sizes = [2, 32], strides = [1, 1]} : vector<2x96xf32> to vector<2x32xf32>
    %117 = arith.mulf %115, %116 : vector<2x32xf32>
    %118 = arith.addf %114, %117 : vector<2x32xf32>
    %119 = math.tanh %118 : vector<2x32xf32>
    %120 = vector.extract_strided_slice %113 {offsets = [0, 32], sizes = [2, 32], strides = [1, 1]} : vector<2x64xf32> to vector<2x32xf32>
    %121 = arith.subf %76, %119 : vector<2x32xf32>
    %122 = arith.mulf %120, %121 : vector<2x32xf32>
    %123 = arith.addf %119, %122 : vector<2x32xf32>
    %124 = tpu.concatenate %123, %100 in 1 : vector<2x32xf32>, vector<2x32xf32> -> vector<2x64xf32>
    %125 = arith.truncf %124 : vector<2x64xf32> to vector<2x64xbf16>
    %c0_28 = arith.constant 0 : index
    %c0_29 = arith.constant 0 : index
    %126 = vector.load %arg3[%c0_28, %c0_29] : memref<64x256xbf16, #tpu.memory_space<vmem>>, vector<64x256xbf16>
    %cst_30 = arith.constant dense<0.000000e+00> : vector<2x256xf32>
    %127 = tpu.matmul %125, %126, %cst_30 {dimension_numbers = #tpu.dot_dimension_numbers<[1], [0], [0], [1], [0, 0, 1, 1], [], []>} : vector<2x64xbf16>, vector<64x256xbf16>, vector<2x256xf32> -> vector<2x256xf32>
    %c0_31 = arith.constant 0 : index
    %c0_32 = arith.constant 0 : index
    %128 = vector.load %arg4[%c0_31, %c0_32] : memref<1x256xf32, #tpu.memory_space<vmem>>, vector<1x256xf32>
    %129 = vector.broadcast %128 : vector<1x256xf32> to vector<2x256xf32>
    %130 = arith.addf %127, %129 : vector<2x256xf32>
    %131 = vector.extract_strided_slice %130 {offsets = [0, 0], sizes = [2, 128], strides = [1, 1]} : vector<2x256xf32> to vector<2x128xf32>
    %132 = vector.extract_strided_slice %131 {offsets = [0, 0], sizes = [2, 64], strides = [1, 1]} : vector<2x128xf32> to vector<2x64xf32>
    %133 = arith.negf %132 : vector<2x64xf32>
    %134 = math.exp %133 : vector<2x64xf32>
    %cst_33 = arith.constant 1.000000e+00 : f32
    %135 = vector.broadcast %cst_33 : f32 to vector<2x64xf32>
    %136 = arith.addf %135, %134 : vector<2x64xf32>
    %137 = arith.divf %135, %136 : vector<2x64xf32>
    %138 = vector.extract_strided_slice %131 {offsets = [0, 64], sizes = [2, 32], strides = [1, 1]} : vector<2x128xf32> to vector<2x32xf32>
    %139 = vector.extract_strided_slice %137 {offsets = [0, 0], sizes = [2, 32], strides = [1, 1]} : vector<2x64xf32> to vector<2x32xf32>
    %140 = vector.extract_strided_slice %131 {offsets = [0, 96], sizes = [2, 32], strides = [1, 1]} : vector<2x128xf32> to vector<2x32xf32>
    %141 = arith.mulf %139, %140 : vector<2x32xf32>
    %142 = arith.addf %138, %141 : vector<2x32xf32>
    %143 = math.tanh %142 : vector<2x32xf32>
    %144 = vector.extract_strided_slice %137 {offsets = [0, 32], sizes = [2, 32], strides = [1, 1]} : vector<2x64xf32> to vector<2x32xf32>
    %145 = arith.subf %100, %143 : vector<2x32xf32>
    %146 = arith.mulf %144, %145 : vector<2x32xf32>
    %147 = arith.addf %143, %146 : vector<2x32xf32>
    %c2 = arith.constant 2 : index
    %c0_34 = arith.constant 0 : index
    %c0_35 = arith.constant 0 : index
    %148 = vector.load %arg5[%c2, %c0_34, %c0_35] : memref<8x2x32xf32, #tpu.memory_space<vmem>>, vector<1x2x32xf32>
    %149 = vector.shape_cast %148 : vector<1x2x32xf32> to vector<2x32xf32>
    %150 = vector.shape_cast %147 : vector<2x32xf32> to vector<1x2x32xf32>
    tpu.vector_store %arg5[%c2, %c0_34, %c0_35], %150 {strides = array<i32>} : memref<8x2x32xf32, #tpu.memory_space<vmem>>, vector<1x2x32xf32>,
    %151 = vector.extract_strided_slice %5 {offsets = [6, 0], sizes = [2, 96], strides = [1, 1]} : vector<16x96xf32> to vector<2x96xf32>
    %152 = vector.extract_strided_slice %130 {offsets = [0, 128], sizes = [2, 96], strides = [1, 1]} : vector<2x256xf32> to vector<2x96xf32>
    %153 = vector.extract_strided_slice %151 {offsets = [0, 0], sizes = [2, 64], strides = [1, 1]} : vector<2x96xf32> to vector<2x64xf32>
    %154 = vector.extract_strided_slice %152 {offsets = [0, 0], sizes = [2, 64], strides = [1, 1]} : vector<2x96xf32> to vector<2x64xf32>
    %155 = arith.addf %153, %154 : vector<2x64xf32>
    %156 = arith.negf %155 : vector<2x64xf32>
    %157 = math.exp %156 : vector<2x64xf32>
    %cst_36 = arith.constant 1.000000e+00 : f32
    %158 = vector.broadcast %cst_36 : f32 to vector<2x64xf32>
    %159 = arith.addf %158, %157 : vector<2x64xf32>
    %160 = arith.divf %158, %159 : vector<2x64xf32>
    %161 = vector.extract_strided_slice %151 {offsets = [0, 64], sizes = [2, 32], strides = [1, 1]} : vector<2x96xf32> to vector<2x32xf32>
    %162 = vector.extract_strided_slice %160 {offsets = [0, 0], sizes = [2, 32], strides = [1, 1]} : vector<2x64xf32> to vector<2x32xf32>
    %163 = vector.extract_strided_slice %152 {offsets = [0, 64], sizes = [2, 32], strides = [1, 1]} : vector<2x96xf32> to vector<2x32xf32>
    %164 = arith.mulf %162, %163 : vector<2x32xf32>
    %165 = arith.addf %161, %164 : vector<2x32xf32>
    %166 = math.tanh %165 : vector<2x32xf32>
    %167 = vector.extract_strided_slice %160 {offsets = [0, 32], sizes = [2, 32], strides = [1, 1]} : vector<2x64xf32> to vector<2x32xf32>
    %168 = arith.subf %123, %166 : vector<2x32xf32>
    %169 = arith.mulf %167, %168 : vector<2x32xf32>
    %170 = arith.addf %166, %169 : vector<2x32xf32>
    %171 = tpu.concatenate %170, %147 in 1 : vector<2x32xf32>, vector<2x32xf32> -> vector<2x64xf32>
    %172 = arith.truncf %171 : vector<2x64xf32> to vector<2x64xbf16>
    %c0_37 = arith.constant 0 : index
    %c0_38 = arith.constant 0 : index
    %173 = vector.load %arg3[%c0_37, %c0_38] : memref<64x256xbf16, #tpu.memory_space<vmem>>, vector<64x256xbf16>
    %cst_39 = arith.constant dense<0.000000e+00> : vector<2x256xf32>
    %174 = tpu.matmul %172, %173, %cst_39 {dimension_numbers = #tpu.dot_dimension_numbers<[1], [0], [0], [1], [0, 0, 1, 1], [], []>} : vector<2x64xbf16>, vector<64x256xbf16>, vector<2x256xf32> -> vector<2x256xf32>
    %c0_40 = arith.constant 0 : index
    %c0_41 = arith.constant 0 : index
    %175 = vector.load %arg4[%c0_40, %c0_41] : memref<1x256xf32, #tpu.memory_space<vmem>>, vector<1x256xf32>
    %176 = vector.broadcast %175 : vector<1x256xf32> to vector<2x256xf32>
    %177 = arith.addf %174, %176 : vector<2x256xf32>
    %178 = vector.extract_strided_slice %177 {offsets = [0, 0], sizes = [2, 128], strides = [1, 1]} : vector<2x256xf32> to vector<2x128xf32>
    %179 = vector.extract_strided_slice %178 {offsets = [0, 0], sizes = [2, 64], strides = [1, 1]} : vector<2x128xf32> to vector<2x64xf32>
    %180 = arith.negf %179 : vector<2x64xf32>
    %181 = math.exp %180 : vector<2x64xf32>
    %cst_42 = arith.constant 1.000000e+00 : f32
    %182 = vector.broadcast %cst_42 : f32 to vector<2x64xf32>
    %183 = arith.addf %182, %181 : vector<2x64xf32>
    %184 = arith.divf %182, %183 : vector<2x64xf32>
    %185 = vector.extract_strided_slice %178 {offsets = [0, 64], sizes = [2, 32], strides = [1, 1]} : vector<2x128xf32> to vector<2x32xf32>
    %186 = vector.extract_strided_slice %184 {offsets = [0, 0], sizes = [2, 32], strides = [1, 1]} : vector<2x64xf32> to vector<2x32xf32>
    %187 = vector.extract_strided_slice %178 {offsets = [0, 96], sizes = [2, 32], strides = [1, 1]} : vector<2x128xf32> to vector<2x32xf32>
    %188 = arith.mulf %186, %187 : vector<2x32xf32>
    %189 = arith.addf %185, %188 : vector<2x32xf32>
    %190 = math.tanh %189 : vector<2x32xf32>
    %191 = vector.extract_strided_slice %184 {offsets = [0, 32], sizes = [2, 32], strides = [1, 1]} : vector<2x64xf32> to vector<2x32xf32>
    %192 = arith.subf %147, %190 : vector<2x32xf32>
    %193 = arith.mulf %191, %192 : vector<2x32xf32>
    %194 = arith.addf %190, %193 : vector<2x32xf32>
    %c3 = arith.constant 3 : index
    %c0_43 = arith.constant 0 : index
    %c0_44 = arith.constant 0 : index
    %195 = vector.load %arg5[%c3, %c0_43, %c0_44] : memref<8x2x32xf32, #tpu.memory_space<vmem>>, vector<1x2x32xf32>
    %196 = vector.shape_cast %195 : vector<1x2x32xf32> to vector<2x32xf32>
    %197 = vector.shape_cast %194 : vector<2x32xf32> to vector<1x2x32xf32>
    tpu.vector_store %arg5[%c3, %c0_43, %c0_44], %197 {strides = array<i32>} : memref<8x2x32xf32, #tpu.memory_space<vmem>>, vector<1x2x32xf32>,
    %198 = vector.extract_strided_slice %5 {offsets = [8, 0], sizes = [2, 96], strides = [1, 1]} : vector<16x96xf32> to vector<2x96xf32>
    %199 = vector.extract_strided_slice %177 {offsets = [0, 128], sizes = [2, 96], strides = [1, 1]} : vector<2x256xf32> to vector<2x96xf32>
    %200 = vector.extract_strided_slice %198 {offsets = [0, 0], sizes = [2, 64], strides = [1, 1]} : vector<2x96xf32> to vector<2x64xf32>
    %201 = vector.extract_strided_slice %199 {offsets = [0, 0], sizes = [2, 64], strides = [1, 1]} : vector<2x96xf32> to vector<2x64xf32>
    %202 = arith.addf %200, %201 : vector<2x64xf32>
    %203 = arith.negf %202 : vector<2x64xf32>
    %204 = math.exp %203 : vector<2x64xf32>
    %cst_45 = arith.constant 1.000000e+00 : f32
    %205 = vector.broadcast %cst_45 : f32 to vector<2x64xf32>
    %206 = arith.addf %205, %204 : vector<2x64xf32>
    %207 = arith.divf %205, %206 : vector<2x64xf32>
    %208 = vector.extract_strided_slice %198 {offsets = [0, 64], sizes = [2, 32], strides = [1, 1]} : vector<2x96xf32> to vector<2x32xf32>
    %209 = vector.extract_strided_slice %207 {offsets = [0, 0], sizes = [2, 32], strides = [1, 1]} : vector<2x64xf32> to vector<2x32xf32>
    %210 = vector.extract_strided_slice %199 {offsets = [0, 64], sizes = [2, 32], strides = [1, 1]} : vector<2x96xf32> to vector<2x32xf32>
    %211 = arith.mulf %209, %210 : vector<2x32xf32>
    %212 = arith.addf %208, %211 : vector<2x32xf32>
    %213 = math.tanh %212 : vector<2x32xf32>
    %214 = vector.extract_strided_slice %207 {offsets = [0, 32], sizes = [2, 32], strides = [1, 1]} : vector<2x64xf32> to vector<2x32xf32>
    %215 = arith.subf %170, %213 : vector<2x32xf32>
    %216 = arith.mulf %214, %215 : vector<2x32xf32>
    %217 = arith.addf %213, %216 : vector<2x32xf32>
    %218 = tpu.concatenate %217, %194 in 1 : vector<2x32xf32>, vector<2x32xf32> -> vector<2x64xf32>
    %219 = arith.truncf %218 : vector<2x64xf32> to vector<2x64xbf16>
    %c0_46 = arith.constant 0 : index
    %c0_47 = arith.constant 0 : index
    %220 = vector.load %arg3[%c0_46, %c0_47] : memref<64x256xbf16, #tpu.memory_space<vmem>>, vector<64x256xbf16>
    %cst_48 = arith.constant dense<0.000000e+00> : vector<2x256xf32>
    %221 = tpu.matmul %219, %220, %cst_48 {dimension_numbers = #tpu.dot_dimension_numbers<[1], [0], [0], [1], [0, 0, 1, 1], [], []>} : vector<2x64xbf16>, vector<64x256xbf16>, vector<2x256xf32> -> vector<2x256xf32>
    %c0_49 = arith.constant 0 : index
    %c0_50 = arith.constant 0 : index
    %222 = vector.load %arg4[%c0_49, %c0_50] : memref<1x256xf32, #tpu.memory_space<vmem>>, vector<1x256xf32>
    %223 = vector.broadcast %222 : vector<1x256xf32> to vector<2x256xf32>
    %224 = arith.addf %221, %223 : vector<2x256xf32>
    %225 = vector.extract_strided_slice %224 {offsets = [0, 0], sizes = [2, 128], strides = [1, 1]} : vector<2x256xf32> to vector<2x128xf32>
    %226 = vector.extract_strided_slice %225 {offsets = [0, 0], sizes = [2, 64], strides = [1, 1]} : vector<2x128xf32> to vector<2x64xf32>
    %227 = arith.negf %226 : vector<2x64xf32>
    %228 = math.exp %227 : vector<2x64xf32>
    %cst_51 = arith.constant 1.000000e+00 : f32
    %229 = vector.broadcast %cst_51 : f32 to vector<2x64xf32>
    %230 = arith.addf %229, %228 : vector<2x64xf32>
    %231 = arith.divf %229, %230 : vector<2x64xf32>
    %232 = vector.extract_strided_slice %225 {offsets = [0, 64], sizes = [2, 32], strides = [1, 1]} : vector<2x128xf32> to vector<2x32xf32>
    %233 = vector.extract_strided_slice %231 {offsets = [0, 0], sizes = [2, 32], strides = [1, 1]} : vector<2x64xf32> to vector<2x32xf32>
    %234 = vector.extract_strided_slice %225 {offsets = [0, 96], sizes = [2, 32], strides = [1, 1]} : vector<2x128xf32> to vector<2x32xf32>
    %235 = arith.mulf %233, %234 : vector<2x32xf32>
    %236 = arith.addf %232, %235 : vector<2x32xf32>
    %237 = math.tanh %236 : vector<2x32xf32>
    %238 = vector.extract_strided_slice %231 {offsets = [0, 32], sizes = [2, 32], strides = [1, 1]} : vector<2x64xf32> to vector<2x32xf32>
    %239 = arith.subf %194, %237 : vector<2x32xf32>
    %240 = arith.mulf %238, %239 : vector<2x32xf32>
    %241 = arith.addf %237, %240 : vector<2x32xf32>
    %c4 = arith.constant 4 : index
    %c0_52 = arith.constant 0 : index
    %c0_53 = arith.constant 0 : index
    %242 = vector.load %arg5[%c4, %c0_52, %c0_53] : memref<8x2x32xf32, #tpu.memory_space<vmem>>, vector<1x2x32xf32>
    %243 = vector.shape_cast %242 : vector<1x2x32xf32> to vector<2x32xf32>
    %244 = vector.shape_cast %241 : vector<2x32xf32> to vector<1x2x32xf32>
    tpu.vector_store %arg5[%c4, %c0_52, %c0_53], %244 {strides = array<i32>} : memref<8x2x32xf32, #tpu.memory_space<vmem>>, vector<1x2x32xf32>,
    %245 = vector.extract_strided_slice %5 {offsets = [10, 0], sizes = [2, 96], strides = [1, 1]} : vector<16x96xf32> to vector<2x96xf32>
    %246 = vector.extract_strided_slice %224 {offsets = [0, 128], sizes = [2, 96], strides = [1, 1]} : vector<2x256xf32> to vector<2x96xf32>
    %247 = vector.extract_strided_slice %245 {offsets = [0, 0], sizes = [2, 64], strides = [1, 1]} : vector<2x96xf32> to vector<2x64xf32>
    %248 = vector.extract_strided_slice %246 {offsets = [0, 0], sizes = [2, 64], strides = [1, 1]} : vector<2x96xf32> to vector<2x64xf32>
    %249 = arith.addf %247, %248 : vector<2x64xf32>
    %250 = arith.negf %249 : vector<2x64xf32>
    %251 = math.exp %250 : vector<2x64xf32>
    %cst_54 = arith.constant 1.000000e+00 : f32
    %252 = vector.broadcast %cst_54 : f32 to vector<2x64xf32>
    %253 = arith.addf %252, %251 : vector<2x64xf32>
    %254 = arith.divf %252, %253 : vector<2x64xf32>
    %255 = vector.extract_strided_slice %245 {offsets = [0, 64], sizes = [2, 32], strides = [1, 1]} : vector<2x96xf32> to vector<2x32xf32>
    %256 = vector.extract_strided_slice %254 {offsets = [0, 0], sizes = [2, 32], strides = [1, 1]} : vector<2x64xf32> to vector<2x32xf32>
    %257 = vector.extract_strided_slice %246 {offsets = [0, 64], sizes = [2, 32], strides = [1, 1]} : vector<2x96xf32> to vector<2x32xf32>
    %258 = arith.mulf %256, %257 : vector<2x32xf32>
    %259 = arith.addf %255, %258 : vector<2x32xf32>
    %260 = math.tanh %259 : vector<2x32xf32>
    %261 = vector.extract_strided_slice %254 {offsets = [0, 32], sizes = [2, 32], strides = [1, 1]} : vector<2x64xf32> to vector<2x32xf32>
    %262 = arith.subf %217, %260 : vector<2x32xf32>
    %263 = arith.mulf %261, %262 : vector<2x32xf32>
    %264 = arith.addf %260, %263 : vector<2x32xf32>
    %265 = tpu.concatenate %264, %241 in 1 : vector<2x32xf32>, vector<2x32xf32> -> vector<2x64xf32>
    %266 = arith.truncf %265 : vector<2x64xf32> to vector<2x64xbf16>
    %c0_55 = arith.constant 0 : index
    %c0_56 = arith.constant 0 : index
    %267 = vector.load %arg3[%c0_55, %c0_56] : memref<64x256xbf16, #tpu.memory_space<vmem>>, vector<64x256xbf16>
    %cst_57 = arith.constant dense<0.000000e+00> : vector<2x256xf32>
    %268 = tpu.matmul %266, %267, %cst_57 {dimension_numbers = #tpu.dot_dimension_numbers<[1], [0], [0], [1], [0, 0, 1, 1], [], []>} : vector<2x64xbf16>, vector<64x256xbf16>, vector<2x256xf32> -> vector<2x256xf32>
    %c0_58 = arith.constant 0 : index
    %c0_59 = arith.constant 0 : index
    %269 = vector.load %arg4[%c0_58, %c0_59] : memref<1x256xf32, #tpu.memory_space<vmem>>, vector<1x256xf32>
    %270 = vector.broadcast %269 : vector<1x256xf32> to vector<2x256xf32>
    %271 = arith.addf %268, %270 : vector<2x256xf32>
    %272 = vector.extract_strided_slice %271 {offsets = [0, 0], sizes = [2, 128], strides = [1, 1]} : vector<2x256xf32> to vector<2x128xf32>
    %273 = vector.extract_strided_slice %272 {offsets = [0, 0], sizes = [2, 64], strides = [1, 1]} : vector<2x128xf32> to vector<2x64xf32>
    %274 = arith.negf %273 : vector<2x64xf32>
    %275 = math.exp %274 : vector<2x64xf32>
    %cst_60 = arith.constant 1.000000e+00 : f32
    %276 = vector.broadcast %cst_60 : f32 to vector<2x64xf32>
    %277 = arith.addf %276, %275 : vector<2x64xf32>
    %278 = arith.divf %276, %277 : vector<2x64xf32>
    %279 = vector.extract_strided_slice %272 {offsets = [0, 64], sizes = [2, 32], strides = [1, 1]} : vector<2x128xf32> to vector<2x32xf32>
    %280 = vector.extract_strided_slice %278 {offsets = [0, 0], sizes = [2, 32], strides = [1, 1]} : vector<2x64xf32> to vector<2x32xf32>
    %281 = vector.extract_strided_slice %272 {offsets = [0, 96], sizes = [2, 32], strides = [1, 1]} : vector<2x128xf32> to vector<2x32xf32>
    %282 = arith.mulf %280, %281 : vector<2x32xf32>
    %283 = arith.addf %279, %282 : vector<2x32xf32>
    %284 = math.tanh %283 : vector<2x32xf32>
    %285 = vector.extract_strided_slice %278 {offsets = [0, 32], sizes = [2, 32], strides = [1, 1]} : vector<2x64xf32> to vector<2x32xf32>
    %286 = arith.subf %241, %284 : vector<2x32xf32>
    %287 = arith.mulf %285, %286 : vector<2x32xf32>
    %288 = arith.addf %284, %287 : vector<2x32xf32>
    %c5 = arith.constant 5 : index
    %c0_61 = arith.constant 0 : index
    %c0_62 = arith.constant 0 : index
    %289 = vector.load %arg5[%c5, %c0_61, %c0_62] : memref<8x2x32xf32, #tpu.memory_space<vmem>>, vector<1x2x32xf32>
    %290 = vector.shape_cast %289 : vector<1x2x32xf32> to vector<2x32xf32>
    %291 = vector.shape_cast %288 : vector<2x32xf32> to vector<1x2x32xf32>
    tpu.vector_store %arg5[%c5, %c0_61, %c0_62], %291 {strides = array<i32>} : memref<8x2x32xf32, #tpu.memory_space<vmem>>, vector<1x2x32xf32>,
    %292 = vector.extract_strided_slice %5 {offsets = [12, 0], sizes = [2, 96], strides = [1, 1]} : vector<16x96xf32> to vector<2x96xf32>
    %293 = vector.extract_strided_slice %271 {offsets = [0, 128], sizes = [2, 96], strides = [1, 1]} : vector<2x256xf32> to vector<2x96xf32>
    %294 = vector.extract_strided_slice %292 {offsets = [0, 0], sizes = [2, 64], strides = [1, 1]} : vector<2x96xf32> to vector<2x64xf32>
    %295 = vector.extract_strided_slice %293 {offsets = [0, 0], sizes = [2, 64], strides = [1, 1]} : vector<2x96xf32> to vector<2x64xf32>
    %296 = arith.addf %294, %295 : vector<2x64xf32>
    %297 = arith.negf %296 : vector<2x64xf32>
    %298 = math.exp %297 : vector<2x64xf32>
    %cst_63 = arith.constant 1.000000e+00 : f32
    %299 = vector.broadcast %cst_63 : f32 to vector<2x64xf32>
    %300 = arith.addf %299, %298 : vector<2x64xf32>
    %301 = arith.divf %299, %300 : vector<2x64xf32>
    %302 = vector.extract_strided_slice %292 {offsets = [0, 64], sizes = [2, 32], strides = [1, 1]} : vector<2x96xf32> to vector<2x32xf32>
    %303 = vector.extract_strided_slice %301 {offsets = [0, 0], sizes = [2, 32], strides = [1, 1]} : vector<2x64xf32> to vector<2x32xf32>
    %304 = vector.extract_strided_slice %293 {offsets = [0, 64], sizes = [2, 32], strides = [1, 1]} : vector<2x96xf32> to vector<2x32xf32>
    %305 = arith.mulf %303, %304 : vector<2x32xf32>
    %306 = arith.addf %302, %305 : vector<2x32xf32>
    %307 = math.tanh %306 : vector<2x32xf32>
    %308 = vector.extract_strided_slice %301 {offsets = [0, 32], sizes = [2, 32], strides = [1, 1]} : vector<2x64xf32> to vector<2x32xf32>
    %309 = arith.subf %264, %307 : vector<2x32xf32>
    %310 = arith.mulf %308, %309 : vector<2x32xf32>
    %311 = arith.addf %307, %310 : vector<2x32xf32>
    %312 = tpu.concatenate %311, %288 in 1 : vector<2x32xf32>, vector<2x32xf32> -> vector<2x64xf32>
    %313 = arith.truncf %312 : vector<2x64xf32> to vector<2x64xbf16>
    %c0_64 = arith.constant 0 : index
    %c0_65 = arith.constant 0 : index
    %314 = vector.load %arg3[%c0_64, %c0_65] : memref<64x256xbf16, #tpu.memory_space<vmem>>, vector<64x256xbf16>
    %cst_66 = arith.constant dense<0.000000e+00> : vector<2x256xf32>
    %315 = tpu.matmul %313, %314, %cst_66 {dimension_numbers = #tpu.dot_dimension_numbers<[1], [0], [0], [1], [0, 0, 1, 1], [], []>} : vector<2x64xbf16>, vector<64x256xbf16>, vector<2x256xf32> -> vector<2x256xf32>
    %c0_67 = arith.constant 0 : index
    %c0_68 = arith.constant 0 : index
    %316 = vector.load %arg4[%c0_67, %c0_68] : memref<1x256xf32, #tpu.memory_space<vmem>>, vector<1x256xf32>
    %317 = vector.broadcast %316 : vector<1x256xf32> to vector<2x256xf32>
    %318 = arith.addf %315, %317 : vector<2x256xf32>
    %319 = vector.extract_strided_slice %318 {offsets = [0, 0], sizes = [2, 128], strides = [1, 1]} : vector<2x256xf32> to vector<2x128xf32>
    %320 = vector.extract_strided_slice %319 {offsets = [0, 0], sizes = [2, 64], strides = [1, 1]} : vector<2x128xf32> to vector<2x64xf32>
    %321 = arith.negf %320 : vector<2x64xf32>
    %322 = math.exp %321 : vector<2x64xf32>
    %cst_69 = arith.constant 1.000000e+00 : f32
    %323 = vector.broadcast %cst_69 : f32 to vector<2x64xf32>
    %324 = arith.addf %323, %322 : vector<2x64xf32>
    %325 = arith.divf %323, %324 : vector<2x64xf32>
    %326 = vector.extract_strided_slice %319 {offsets = [0, 64], sizes = [2, 32], strides = [1, 1]} : vector<2x128xf32> to vector<2x32xf32>
    %327 = vector.extract_strided_slice %325 {offsets = [0, 0], sizes = [2, 32], strides = [1, 1]} : vector<2x64xf32> to vector<2x32xf32>
    %328 = vector.extract_strided_slice %319 {offsets = [0, 96], sizes = [2, 32], strides = [1, 1]} : vector<2x128xf32> to vector<2x32xf32>
    %329 = arith.mulf %327, %328 : vector<2x32xf32>
    %330 = arith.addf %326, %329 : vector<2x32xf32>
    %331 = math.tanh %330 : vector<2x32xf32>
    %332 = vector.extract_strided_slice %325 {offsets = [0, 32], sizes = [2, 32], strides = [1, 1]} : vector<2x64xf32> to vector<2x32xf32>
    %333 = arith.subf %288, %331 : vector<2x32xf32>
    %334 = arith.mulf %332, %333 : vector<2x32xf32>
    %335 = arith.addf %331, %334 : vector<2x32xf32>
    %c6 = arith.constant 6 : index
    %c0_70 = arith.constant 0 : index
    %c0_71 = arith.constant 0 : index
    %336 = vector.load %arg5[%c6, %c0_70, %c0_71] : memref<8x2x32xf32, #tpu.memory_space<vmem>>, vector<1x2x32xf32>
    %337 = vector.shape_cast %336 : vector<1x2x32xf32> to vector<2x32xf32>
    %338 = vector.shape_cast %335 : vector<2x32xf32> to vector<1x2x32xf32>
    tpu.vector_store %arg5[%c6, %c0_70, %c0_71], %338 {strides = array<i32>} : memref<8x2x32xf32, #tpu.memory_space<vmem>>, vector<1x2x32xf32>,
    %339 = vector.extract_strided_slice %5 {offsets = [14, 0], sizes = [2, 96], strides = [1, 1]} : vector<16x96xf32> to vector<2x96xf32>
    %340 = vector.extract_strided_slice %318 {offsets = [0, 128], sizes = [2, 96], strides = [1, 1]} : vector<2x256xf32> to vector<2x96xf32>
    %341 = vector.extract_strided_slice %339 {offsets = [0, 0], sizes = [2, 64], strides = [1, 1]} : vector<2x96xf32> to vector<2x64xf32>
    %342 = vector.extract_strided_slice %340 {offsets = [0, 0], sizes = [2, 64], strides = [1, 1]} : vector<2x96xf32> to vector<2x64xf32>
    %343 = arith.addf %341, %342 : vector<2x64xf32>
    %344 = arith.negf %343 : vector<2x64xf32>
    %345 = math.exp %344 : vector<2x64xf32>
    %cst_72 = arith.constant 1.000000e+00 : f32
    %346 = vector.broadcast %cst_72 : f32 to vector<2x64xf32>
    %347 = arith.addf %346, %345 : vector<2x64xf32>
    %348 = arith.divf %346, %347 : vector<2x64xf32>
    %349 = vector.extract_strided_slice %339 {offsets = [0, 64], sizes = [2, 32], strides = [1, 1]} : vector<2x96xf32> to vector<2x32xf32>
    %350 = vector.extract_strided_slice %348 {offsets = [0, 0], sizes = [2, 32], strides = [1, 1]} : vector<2x64xf32> to vector<2x32xf32>
    %351 = vector.extract_strided_slice %340 {offsets = [0, 64], sizes = [2, 32], strides = [1, 1]} : vector<2x96xf32> to vector<2x32xf32>
    %352 = arith.mulf %350, %351 : vector<2x32xf32>
    %353 = arith.addf %349, %352 : vector<2x32xf32>
    %354 = math.tanh %353 : vector<2x32xf32>
    %355 = vector.extract_strided_slice %348 {offsets = [0, 32], sizes = [2, 32], strides = [1, 1]} : vector<2x64xf32> to vector<2x32xf32>
    %356 = arith.subf %311, %354 : vector<2x32xf32>
    %357 = arith.mulf %355, %356 : vector<2x32xf32>
    %358 = arith.addf %354, %357 : vector<2x32xf32>
    %359 = tpu.concatenate %358, %335 in 1 : vector<2x32xf32>, vector<2x32xf32> -> vector<2x64xf32>
    %360 = arith.truncf %359 : vector<2x64xf32> to vector<2x64xbf16>
    %c0_73 = arith.constant 0 : index
    %c0_74 = arith.constant 0 : index
    %361 = vector.load %arg3[%c0_73, %c0_74] : memref<64x256xbf16, #tpu.memory_space<vmem>>, vector<64x128xbf16>
    %cst_75 = arith.constant dense<0.000000e+00> : vector<2x128xf32>
    %362 = tpu.matmul %360, %361, %cst_75 {dimension_numbers = #tpu.dot_dimension_numbers<[1], [0], [0], [1], [0, 0, 1, 1], [], []>} : vector<2x64xbf16>, vector<64x128xbf16>, vector<2x128xf32> -> vector<2x128xf32>
    %c0_76 = arith.constant 0 : index
    %c0_77 = arith.constant 0 : index
    %363 = vector.load %arg4[%c0_76, %c0_77] : memref<1x256xf32, #tpu.memory_space<vmem>>, vector<1x128xf32>
    %364 = vector.broadcast %363 : vector<1x128xf32> to vector<2x128xf32>
    %365 = arith.addf %362, %364 : vector<2x128xf32>
    %366 = vector.extract_strided_slice %365 {offsets = [0, 0], sizes = [2, 64], strides = [1, 1]} : vector<2x128xf32> to vector<2x64xf32>
    %367 = arith.negf %366 : vector<2x64xf32>
    %368 = math.exp %367 : vector<2x64xf32>
    %cst_78 = arith.constant 1.000000e+00 : f32
    %369 = vector.broadcast %cst_78 : f32 to vector<2x64xf32>
    %370 = arith.addf %369, %368 : vector<2x64xf32>
    %371 = arith.divf %369, %370 : vector<2x64xf32>
    %372 = vector.extract_strided_slice %365 {offsets = [0, 64], sizes = [2, 32], strides = [1, 1]} : vector<2x128xf32> to vector<2x32xf32>
    %373 = vector.extract_strided_slice %371 {offsets = [0, 0], sizes = [2, 32], strides = [1, 1]} : vector<2x64xf32> to vector<2x32xf32>
    %374 = vector.extract_strided_slice %365 {offsets = [0, 96], sizes = [2, 32], strides = [1, 1]} : vector<2x128xf32> to vector<2x32xf32>
    %375 = arith.mulf %373, %374 : vector<2x32xf32>
    %376 = arith.addf %372, %375 : vector<2x32xf32>
    %377 = math.tanh %376 : vector<2x32xf32>
    %378 = vector.extract_strided_slice %371 {offsets = [0, 32], sizes = [2, 32], strides = [1, 1]} : vector<2x64xf32> to vector<2x32xf32>
    %379 = arith.subf %335, %377 : vector<2x32xf32>
    %380 = arith.mulf %378, %379 : vector<2x32xf32>
    %381 = arith.addf %377, %380 : vector<2x32xf32>
    %c7 = arith.constant 7 : index
    %c0_79 = arith.constant 0 : index
    %c0_80 = arith.constant 0 : index
    %382 = vector.load %arg5[%c7, %c0_79, %c0_80] : memref<8x2x32xf32, #tpu.memory_space<vmem>>, vector<1x2x32xf32>
    %383 = vector.shape_cast %382 : vector<1x2x32xf32> to vector<2x32xf32>
    %384 = vector.shape_cast %381 : vector<2x32xf32> to vector<1x2x32xf32>
    tpu.vector_store %arg5[%c7, %c0_79, %c0_80], %384 {strides = array<i32>} : memref<8x2x32xf32, #tpu.memory_space<vmem>>, vector<1x2x32xf32>,
    %c0_81 = arith.constant 0 : index
    %c0_82 = arith.constant 0 : index
    %c0_83 = arith.constant 0 : index
    %385 = vector.load %arg6[%c0_81, %c0_82, %c0_83] : memref<2x2x32xf32, #tpu.memory_space<vmem>>, vector<1x2x32xf32>
    %386 = vector.shape_cast %385 : vector<1x2x32xf32> to vector<2x32xf32>
    %387 = vector.shape_cast %358 : vector<2x32xf32> to vector<1x2x32xf32>
    tpu.vector_store %arg6[%c0_81, %c0_82, %c0_83], %387 {strides = array<i32>} : memref<2x2x32xf32, #tpu.memory_space<vmem>>, vector<1x2x32xf32>,
    %c1_84 = arith.constant 1 : index
    %c0_85 = arith.constant 0 : index
    %c0_86 = arith.constant 0 : index
    %388 = vector.load %arg6[%c1_84, %c0_85, %c0_86] : memref<2x2x32xf32, #tpu.memory_space<vmem>>, vector<1x2x32xf32>
    %389 = vector.shape_cast %388 : vector<1x2x32xf32> to vector<2x32xf32>
    %390 = vector.shape_cast %381 : vector<2x32xf32> to vector<1x2x32xf32>
    tpu.vector_store %arg6[%c1_84, %c0_85, %c0_86], %390 {strides = array<i32>} : memref<2x2x32xf32, #tpu.memory_space<vmem>>, vector<1x2x32xf32>,
    return
  }
}

</mosaic_0001>

<llo_original>
// kernel: tpu_custom_call.1
$region0: #{tpu_custom_call.1}
  #allocation0 [shape = 'u32[]', space=smem, size = 0x4, offset = 0x4, fixed_abs, tag = 'smem constant byte address 0x4 - core index']
  #allocation1 [shape = 'u32[144,128]{1,0:T(1,128)}', space=vmem, size = 0x12000, scoped, tag = 'internal scratch']
  %s0 = inlined_call_operand.hbm [shape: f32[16,16], index: 0, kind: input, shape index: {}]
  %s1 = inlined_call_operand.hbm [shape: f32[16,96], index: 1, kind: input, shape index: {}]
  %s2 = inlined_call_operand.vmem [shape: f32[1,96], index: 2, kind: input, shape index: {}]
  %s3 = inlined_call_operand.hbm [shape: bf16[64,256], index: 3, kind: input, shape index: {}]
  %s4 = inlined_call_operand.vmem [shape: f32[1,256], index: 4, kind: input, shape index: {}]
  %s5 = inlined_call_operand.hbm [shape: f32[8,2,32], index: 5, kind: output, shape index: {0}]
  %s6 = inlined_call_operand.hbm [shape: f32[2,2,32], index: 6, kind: output, shape index: {1}]
  %7 = xla_tuple %s5, %s6
  %s8 = sld [smem:[#allocation0]]
  $region50: #{tpu_custom_call.1} parent=0
    _
  %s10 = ssub.s32 1, %s8
  %s11 = scalar_select 0, %s10, %s8
  $region1: #{tpu_custom_call.1} parent=0
    #allocation2 [shape = 'u8[8192]{0}', space=vmem, size = 0x2000, scoped, tag = 'input window, operand 0, single buffered']
    #allocation3 [shape = 's32[1]{0}', space=sflag, size = 0x4, scoped, tag = 'scoped memory for tpu_custom_call.1']
    #allocation4 [shape = 's32[1]{0}', space=sflag, size = 0x4, scoped, tag = 'scoped memory for tpu_custom_call.1']
    #allocation5 [shape = 'u8[8192]{0}', space=vmem, size = 0x2000, scoped, tag = 'input window, operand 1, single buffered']
    #allocation6 [shape = 's32[1]{0}', space=sflag, size = 0x4, scoped, tag = 'scoped memory for tpu_custom_call.1']
    #allocation7 [shape = 'u8[32768]{0}', space=vmem, size = 0x8000, scoped, tag = 'input window, operand 3, single buffered']
    #allocation8 [shape = 'u8[8192]{0}', space=vmem, size = 0x2000, scoped, tag = 'output window, operand 0, single buffered']
    #allocation9 [shape = 'u8[2048]{0}', space=vmem, size = 0x800, scoped, tag = 'output window, operand 1, single buffered']
    #allocation10 [shape = 's32[1]{0}', space=sflag, size = 0x4, scoped, tag = 'scoped memory for tpu_custom_call.1']
    %12 = vsyncpa [#allocation3], 0
    %13 = vsyncpa [#allocation6], 0
    %14 = vsyncpa [#allocation4], 0
    %15 = vsyncpa [#allocation10], 0
    // Predicated region
    $region2: #{tpu_custom_call.1} parent=1 // pred_check
      _
    $region3: #{tpu_custom_call.1} parent=1 // pred_check_branch
      %17 = sbr.rel (0) target = $region5
    $region4: #{tpu_custom_call.1} parent=1 // pred_region
      %s19 = ssub.s32 256, 256
      %20 = vsyncadd [#allocation3], %s19
      %s21 = sshll.u32 [#allocation2], 4
      %s22 = int_to_ptr.vmem [resolvable:$true] %s21
      %27 = dma.hbm_to_vmem [thread:$0]  %s0, 256, %s22, [#allocation3], 128, 128, 8
    $region5: #{tpu_custom_call.1} parent=1 // pred_fallthru
      _
    // Predicated region
    $region6: #{tpu_custom_call.1} parent=1 // pred_check
      _
    $region7: #{tpu_custom_call.1} parent=1 // pred_check_branch
      %29 = sbr.rel (0) target = $region9
    $region8: #{tpu_custom_call.1} parent=1 // pred_region
      %s31 = ssub.s32 256, 256
      %32 = vsyncadd [#allocation6], %s31
      %s33 = sshll.u32 [#allocation5], 4
      %s34 = int_to_ptr.vmem [resolvable:$true] %s33
      %39 = dma.hbm_to_vmem [thread:$0]  %s1, 256, %s34, [#allocation6], 128, 128, 8
    $region9: #{tpu_custom_call.1} parent=1 // pred_fallthru
      _
    // Predicated region
    $region10: #{tpu_custom_call.1} parent=1 // pred_check
      _
    $region11: #{tpu_custom_call.1} parent=1 // pred_check_branch
      %41 = sbr.rel (0) target = $region13
    $region12: #{tpu_custom_call.1} parent=1 // pred_region
      _
    $region13: #{tpu_custom_call.1} parent=1 // pred_fallthru
      _
    // Predicated region
    $region14: #{tpu_custom_call.1} parent=1 // pred_check
      _
    $region15: #{tpu_custom_call.1} parent=1 // pred_check_branch
      %43 = sbr.rel (0) target = $region17
    $region16: #{tpu_custom_call.1} parent=1 // pred_region
      %s45 = ssub.s32 1024, 1024
      %46 = vsyncadd [#allocation6], %s45
      %s47 = sshll.u32 [#allocation7], 4
      %s48 = int_to_ptr.vmem [resolvable:$true] %s47
      %53 = dma.hbm_to_vmem [thread:$0]  %s3, 1024, %s48, [#allocation6], 128, 128, 8
    $region17: #{tpu_custom_call.1} parent=1 // pred_fallthru
      _
    // Predicated region
    $region18: #{tpu_custom_call.1} parent=1 // pred_check
      _
    $region19: #{tpu_custom_call.1} parent=1 // pred_check_branch
      %55 = sbr.rel (0) target = $region21
    $region20: #{tpu_custom_call.1} parent=1 // pred_region
      _
    $region21: #{tpu_custom_call.1} parent=1 // pred_fallthru
      _
    // Predicated region
    $region22: #{tpu_custom_call.1} parent=1 // pred_check
      _
    $region23: #{tpu_custom_call.1} parent=1 // pred_check_branch
      %57 = sbr.rel (0) target = $region25
    $region24: #{tpu_custom_call.1} parent=1 // pred_region
      %58 = dma.done [#allocation3], 256
    $region25: #{tpu_custom_call.1} parent=1 // pred_fallthru
      _
    // Predicated region
    $region26: #{tpu_custom_call.1} parent=1 // pred_check
      _
    $region27: #{tpu_custom_call.1} parent=1 // pred_check_branch
      %60 = sbr.rel (0) target = $region29
    $region28: #{tpu_custom_call.1} parent=1 // pred_region
      %61 = dma.done [#allocation6], 256
    $region29: #{tpu_custom_call.1} parent=1 // pred_fallthru
      _
    // Predicated region
    $region30: #{tpu_custom_call.1} parent=1 // pred_check
      _
    $region31: #{tpu_custom_call.1} parent=1 // pred_check_branch
      %63 = sbr.rel (0) target = $region33
    $region32: #{tpu_custom_call.1} parent=1 // pred_region
      %64 = dma.done [#allocation6], 1024
    $region33: #{tpu_custom_call.1} parent=1 // pred_fallthru
      _
    %v66 = vld [vmem:[#allocation2] sm:$0xff]
    %v67 = vld [vmem:[#allocation2 + $0x8] sm:$0xff]
    %v68 = vld [vmem:[#allocation5] sm:$0xff]
    %v69 = vld [vmem:[#allocation5 + $0x8] sm:$0xff]
    %v70 = vld [vmem:[%s2] sm:$0x1]
    %v72 = vlaneseq
    %v73 = vshrl.u32 %v72, 7
    %v74 = vsub.s32 0, %v73
    %v75 = vrot.slane %v70, %v74
    %vm77 = vcmask 130048
    %v79 = vsel %vm77, %v66, 0
    %v82 = vsel %vm77, %v67, 0
    %84 = vmatprep.subr.mxu0 0.0
    %85 = vmatpush1.msra.mxu0 %v68
    %86 = vmatprep.subr.mxu0 0.0
    %87 = vmatpush1.msra.mxu0 %v69
    %88 = vmatprep.subr.mxu0 0.0
    %89 = vmatpush1.msra.mxu0 0.0
    %90 = vmatprep.subr.mxu0 0.0
    %91 = vmatpush1.msra.mxu0 0.0
    %92 = vmatprep.subr.mxu0 0.0
    %93 = vmatpush1.msra.mxu0 0.0
    %94 = vmatprep.subr.mxu0 0.0
    %95 = vmatpush1.msra.mxu0 0.0
    %96 = vmatprep.subr.mxu0 0.0
    %97 = vmatpush1.msra.mxu0 0.0
    %98 = vmatprep.subr.mxu0 0.0
    %99 = vmatpush1.msra.mxu0 0.0
    %100 = vmatprep.subr.mxu0 0.0
    %101 = vmatpush1.msra.mxu0 0.0
    %102 = vmatprep.subr.mxu0 0.0
    %103 = vmatpush1.msra.mxu0 0.0
    %104 = vmatprep.subr.mxu0 0.0
    %105 = vmatpush1.msra.mxu0 0.0
    %106 = vmatprep.subr.mxu0 0.0
    %107 = vmatpush1.msra.mxu0 0.0
    %108 = vmatprep.subr.mxu0 0.0
    %109 = vmatpush1.msra.mxu0 0.0
    %110 = vmatprep.subr.mxu0 0.0
    %111 = vmatpush1.msra.mxu0 0.0
    %112 = vmatprep.subr.mxu0 0.0
    %113 = vmatpush1.msra.mxu0 0.0
    %114 = vmatprep.subr.mxu0 0.0
    %115 = vmatpush1.msra.mxu0 0.0
    %116 = vmatprep.subr.mxu0 0.0
    %117 = vmatpush1.msra.mxu0 0.0
    %118 = vmatprep.subr.mxu0 0.0
    %119 = vmatpush1.msra.mxu0 0.0
    %120 = vmatprep.subr.mxu0 0.0
    %121 = vmatpush1.msra.mxu0 0.0
    %122 = vmatprep.subr.mxu0 0.0
    %123 = vmatpush1.msra.mxu0 0.0
    %124 = vmatprep.subr.mxu0 0.0
    %125 = vmatpush1.msra.mxu0 0.0
    %126 = vmatprep.subr.mxu0 0.0
    %127 = vmatpush1.msra.mxu0 0.0
    %128 = vmatprep.subr.mxu0 0.0
    %129 = vmatpush1.msra.mxu0 0.0
    %130 = vmatprep.subr.mxu0 0.0
    %131 = vmatpush1.msra.mxu0 0.0
    %132 = vmatprep.subr.mxu0 0.0
    %133 = vmatpush1.msra.mxu0 0.0
    %134 = vmatprep.subr.mxu0 0.0
    %135 = vmatpush1.msra.mxu0 0.0
    %136 = vmatprep.subr.mxu0 0.0
    %137 = vmatpush1.msra.mxu0 0.0
    %138 = vmatprep.subr.mxu0 0.0
    %139 = vmatpush1.msra.mxu0 0.0
    %140 = vmatprep.subr.mxu0 0.0
    %141 = vmatpush1.msra.mxu0 0.0
    %142 = vmatprep.subr.mxu0 0.0
    %143 = vmatpush1.msra.mxu0 0.0
    %144 = vmatprep.subr.mxu0 0.0
    %145 = vmatpush1.msra.mxu0 0.0
    %146 = vmatprep.subr.mxu0 0.0
    %147 = vmatpush1.msra.mxu0 0.0
    %148 = vmatprep.mubr.f32.mxu0 0.0
    %149 = vmatmul.mubr.f32.gmra.mrb[0].mxu0 %v79
    %v150 = vpop.f32.mrb[0].mxu0
    %v151 = vadd.f32 %v75, %v150
    %v152 = vpop.f32.mrb[0].mxu0
    %153 = vmatprep.mubr.f32.mxu0 0.0
    %154 = vmatmul.mubr.f32.gmra.mrb[0].mxu0 %v82
    %v155 = vpop.f32.mrb[0].mxu0
    %v156 = vadd.f32 %v75, %v155
    %v157 = vpop.f32.mrb[0].mxu0
    %158 = vdwg.mxu0
    %v159 = vld [vmem:[%s4 + $0x1] sm:$0x1]
    %v161 = vlaneseq
    %v162 = vshrl.u32 %v161, 7
    %v163 = vsub.s32 0, %v162
    %v164 = vrot.slane %v159, %v163
    %v166 = vadd.f32 %v151, %v164
    %v167 = vxor.u32 %v166, 2147483648
    %v168 = vmul.f32 %v167, 1.442695
    %v169 = vpow.pop %v168
    %v170 = vadd.f32 %v169, 1.0
    %v171 = vrcp.pop %v170
    %v172 = vmul.f32 1.0, %v171
    %173 = vrot.lane.b32.xlu0 %v164, 64
    %v174 = vpop.permute.xlu0 %173
    %v176 = vmul.f32 %v172, %v174
    %178 = vrot.lane.b32.xlu0 %v176, 64
    %v179 = vpop.permute.xlu0 %178
    %v181 = vadd.f32 %v151, %v179
    %v182 = vtanh.pop %v181
    %v183 = vsub.f32 0.0, %v182
    %185 = vrot.lane.b32.xlu0 %v183, 96
    %v186 = vpop.permute.xlu0 %185
    %v188 = vmul.f32 %v172, %v186
    %190 = vrot.lane.b32.xlu0 %v188, 32
    %v191 = vpop.permute.xlu0 %190
    %v193 = vadd.f32 %v182, %v191
    %195 = vrot.lane.b32.xlu0 %v193, 64
    %v196 = vpop.permute.xlu0 %195
    %vm198 = vcmask 261120
    %v199 = vsel %vm198, %v196, 0.0
    %v200 = vpack.c.bf16 %v199, %v199
    %v201 = vld [vmem:[#allocation7] sm:$0xff]
    %v202 = vld [vmem:[#allocation7 + $0x8] sm:$0xff]
    %v203 = vld [vmem:[#allocation7 + $0x10] sm:$0xff]
    %v204 = vld [vmem:[#allocation7 + $0x18] sm:$0xff]
    %v205 = vld [vmem:[#allocation7 + $0x20] sm:$0xff]
    %v206 = vld [vmem:[#allocation7 + $0x28] sm:$0xff]
    %v207 = vld [vmem:[#allocation7 + $0x30] sm:$0xff]
    %v208 = vld [vmem:[#allocation7 + $0x38] sm:$0xff]
    %v209 = vld [vmem:[%s4] sm:$0x3]
    %v211 = vlaneseq
    %v212 = vshrl.u32 %v211, 7
    %v213 = vsub.s32 0, %v212
    %v214 = vrot.slane %v209, %v213
    %v215 = vlaneseq
    %v216 = vshrl.u32 %v215, 7
    %v217 = vsub.s32 1, %v216
    %v218 = vrot.slane %v209, %v217
    %v229 = vunpack.c.l.b16 %v201
    %v230 = vunpack.c.h.b16 %v201
    %v231 = vunpack.c.l.b16 %v202
    %v232 = vunpack.c.h.b16 %v202
    %v233 = vunpack.c.l.b16 %v203
    %v234 = vunpack.c.h.b16 %v203
    %v235 = vunpack.c.l.b16 %v204
    %v236 = vunpack.c.h.b16 %v204
    %v237 = vunpack.c.l.b16 %v205
    %v238 = vunpack.c.h.b16 %v205
    %v239 = vunpack.c.l.b16 %v206
    %v240 = vunpack.c.h.b16 %v206
    %v241 = vunpack.c.l.b16 %v207
    %v242 = vunpack.c.h.b16 %v207
    %v243 = vunpack.c.l.b16 %v208
    %v244 = vunpack.c.h.b16 %v208
    %v245 = vpack.c.b16 %v231, %v229
    %v246 = vpack.c.b16 %v232, %v230
    %v247 = vpack.c.b16 %v235, %v233
    %v248 = vpack.c.b16 %v236, %v234
    %v249 = vpack.c.b16 %v239, %v237
    %v250 = vpack.c.b16 %v240, %v238
    %v251 = vpack.c.b16 %v243, %v241
    %v252 = vpack.c.b16 %v244, %v242
    %vm261 = vcmask 523264
    %v263 = vsel %vm261, %v200, 0
    %265 = vmatprep.subr.bf16.mxu0 %v246
    %266 = vmatpush1.bf16.msra.mxu0 %v245
    %267 = vmatprep.subr.bf16.mxu0 %v248
    %268 = vmatpush1.bf16.msra.mxu0 %v247
    %269 = vmatprep.subr.bf16.mxu0 %v250
    %270 = vmatpush1.bf16.msra.mxu0 %v249
    %271 = vmatprep.subr.bf16.mxu0 %v252
    %272 = vmatpush1.bf16.msra.mxu0 %v251
    %273 = vmatprep.subr.bf16.mxu0 0
    %274 = vmatpush1.bf16.msra.mxu0 0
    %275 = vmatprep.subr.bf16.mxu0 0
    %276 = vmatpush1.bf16.msra.mxu0 0
    %277 = vmatprep.subr.bf16.mxu0 0
    %278 = vmatpush1.bf16.msra.mxu0 0
    %279 = vmatprep.subr.bf16.mxu0 0
    %280 = vmatpush1.bf16.msra.mxu0 0
    %281 = vmatprep.subr.bf16.mxu0 0
    %282 = vmatpush1.bf16.msra.mxu0 0
    %283 = vmatprep.subr.bf16.mxu0 0
    %284 = vmatpush1.bf16.msra.mxu0 0
    %285 = vmatprep.subr.bf16.mxu0 0
    %286 = vmatpush1.bf16.msra.mxu0 0
    %287 = vmatprep.subr.bf16.mxu0 0
    %288 = vmatpush1.bf16.msra.mxu0 0
    %289 = vmatprep.subr.bf16.mxu0 0
    %290 = vmatpush1.bf16.msra.mxu0 0
    %291 = vmatprep.subr.bf16.mxu0 0
    %292 = vmatpush1.bf16.msra.mxu0 0
    %293 = vmatprep.subr.bf16.mxu0 0
    %294 = vmatpush1.bf16.msra.mxu0 0
    %295 = vmatprep.subr.bf16.mxu0 0
    %296 = vmatpush1.bf16.msra.mxu0 0
    %297 = vmatprep.mubr.bf16.mxu0 0
    %298 = vmatmul.mubr.bf16.gmra.mrb[0].mxu0 %v263
    %v299 = vpop.f32.mrb[0].mxu0
    %v300 = vadd.f32 %v214, %v299
    %v301 = vpop.f32.mrb[0].mxu0
    %v302 = vadd.f32 %v218, %v301
    %v303 = vpop.f32.mrb[0].mxu0
    %v304 = vpop.f32.mrb[0].mxu0
    %305 = vdwg.mxu0
    %v306 = vxor.u32 %v300, 2147483648
    %v307 = vmul.f32 %v306, 1.442695
    %v308 = vpow.pop %v307
    %v309 = vadd.f32 %v308, 1.0
    %v310 = vrcp.pop %v309
    %v311 = vmul.f32 1.0, %v310
    %313 = vrot.lane.b32.xlu0 %v300, 32
    %v314 = vpop.permute.xlu0 %313
    %v316 = vmul.f32 %v311, %v314
    %318 = vrot.lane.b32.xlu0 %v316, 64
    %v319 = vpop.permute.xlu0 %318
    %v321 = vadd.f32 %v300, %v319
    %v322 = vtanh.pop %v321
    %v323 = vsub.f32 0.0, %v322
    %325 = vrot.lane.b32.xlu0 %v323, 96
    %v326 = vpop.permute.xlu0 %325
    %v328 = vmul.f32 %v311, %v326
    %330 = vrot.lane.b32.xlu0 %v328, 32
    %v331 = vpop.permute.xlu0 %330
    %v333 = vadd.f32 %v322, %v331
    %335 = vrot.lane.b32.xlu0 %v333, 64
    %v336 = vpop.permute.xlu0 %335
    %vm338 = vcmask 254976
    %339 = vst.msk [vmem:[#allocation8] sm:$0x3] %vm338, %v336
    %v341 = vrot.slane %v302, 6
    %v343 = vadd.f32 %v151, %v341
    %v344 = vxor.u32 %v343, 2147483648
    %v345 = vmul.f32 %v344, 1.442695
    %v346 = vpow.pop %v345
    %v347 = vadd.f32 %v346, 1.0
    %v348 = vrcp.pop %v347
    %v349 = vmul.f32 1.0, %v348
    %350 = vrot.lane.b32.xlu0 %v341, 64
    %v351 = vpop.permute.xlu0 %350
    %v353 = vmul.f32 %v349, %v351
    %355 = vrot.lane.b32.xlu0 %v353, 64
    %v356 = vpop.permute.xlu0 %355
    %v358 = vadd.f32 %v151, %v356
    %v359 = vtanh.pop %v358
    %v361 = vrot.slane %v359, 2
    %v363 = vsub.f32 %v193, %v361
    %v365 = vrot.slane %v363, 6
    %366 = vrot.lane.b32.xlu0 %v365, 96
    %v367 = vpop.permute.xlu0 %366
    %v369 = vmul.f32 %v349, %v367
    %371 = vrot.lane.b32.xlu0 %v369, 32
    %v372 = vpop.permute.xlu0 %371
    %v374 = vadd.f32 %v359, %v372
    %376 = vrot.lane.b32.xlu0 %v374, 64
    %v377 = vpop.permute.xlu0 %376
    %v379 = vrot.slane %v333, 6
    %380 = vrot.lane.b32.xlu0 %v379, 96
    %v381 = vpop.permute.xlu0 %380
    %v383 = vsel %vm198, %v377, %v381
    %v384 = vpack.c.bf16 %v383, %v383
    %v385 = vld [vmem:[#allocation7] sm:$0xff]
    %v386 = vld [vmem:[#allocation7 + $0x8] sm:$0xff]
    %v387 = vld [vmem:[#allocation7 + $0x10] sm:$0xff]
    %v388 = vld [vmem:[#allocation7 + $0x18] sm:$0xff]
    %v389 = vld [vmem:[#allocation7 + $0x20] sm:$0xff]
    %v390 = vld [vmem:[#allocation7 + $0x28] sm:$0xff]
    %v391 = vld [vmem:[#allocation7 + $0x30] sm:$0xff]
    %v392 = vld [vmem:[#allocation7 + $0x38] sm:$0xff]
    %v393 = vld [vmem:[%s4] sm:$0x3]
    %v395 = vlaneseq
    %v396 = vshrl.u32 %v395, 7
    %v397 = vsub.s32 0, %v396
    %v398 = vrot.slane %v393, %v397
    %v399 = vlaneseq
    %v400 = vshrl.u32 %v399, 7
    %v401 = vsub.s32 1, %v400
    %v402 = vrot.slane %v393, %v401
    %v406 = vrot.slane %v384, 1
    %v415 = vunpack.c.l.b16 %v385
    %v416 = vunpack.c.h.b16 %v385
    %v417 = vunpack.c.l.b16 %v386
    %v418 = vunpack.c.h.b16 %v386
    %v419 = vunpack.c.l.b16 %v387
    %v420 = vunpack.c.h.b16 %v387
    %v421 = vunpack.c.l.b16 %v388
    %v422 = vunpack.c.h.b16 %v388
    %v423 = vunpack.c.l.b16 %v389
    %v424 = vunpack.c.h.b16 %v389
    %v425 = vunpack.c.l.b16 %v390
    %v426 = vunpack.c.h.b16 %v390
    %v427 = vunpack.c.l.b16 %v391
    %v428 = vunpack.c.h.b16 %v391
    %v429 = vunpack.c.l.b16 %v392
    %v430 = vunpack.c.h.b16 %v392
    %v431 = vpack.c.b16 %v417, %v415
    %v432 = vpack.c.b16 %v418, %v416
    %v433 = vpack.c.b16 %v421, %v419
    %v434 = vpack.c.b16 %v422, %v420
    %v435 = vpack.c.b16 %v425, %v423
    %v436 = vpack.c.b16 %v426, %v424
    %v437 = vpack.c.b16 %v429, %v427
    %v438 = vpack.c.b16 %v430, %v428
    %v448 = vsel %vm261, %v406, 0
    %450 = vmatprep.subr.bf16.mxu0 %v432
    %451 = vmatpush1.bf16.msra.mxu0 %v431
    %452 = vmatprep.subr.bf16.mxu0 %v434
    %453 = vmatpush1.bf16.msra.mxu0 %v433
    %454 = vmatprep.subr.bf16.mxu0 %v436
    %455 = vmatpush1.bf16.msra.mxu0 %v435
    %456 = vmatprep.subr.bf16.mxu0 %v438
    %457 = vmatpush1.bf16.msra.mxu0 %v437
    %458 = vmatprep.subr.bf16.mxu0 0
    %459 = vmatpush1.bf16.msra.mxu0 0
    %460 = vmatprep.subr.bf16.mxu0 0
    %461 = vmatpush1.bf16.msra.mxu0 0
    %462 = vmatprep.subr.bf16.mxu0 0
    %463 = vmatpush1.bf16.msra.mxu0 0
    %464 = vmatprep.subr.bf16.mxu0 0
    %465 = vmatpush1.bf16.msra.mxu0 0
    %466 = vmatprep.subr.bf16.mxu0 0
    %467 = vmatpush1.bf16.msra.mxu0 0
    %468 = vmatprep.subr.bf16.mxu0 0
    %469 = vmatpush1.bf16.msra.mxu0 0
    %470 = vmatprep.subr.bf16.mxu0 0
    %471 = vmatpush1.bf16.msra.mxu0 0
    %472 = vmatprep.subr.bf16.mxu0 0
    %473 = vmatpush1.bf16.msra.mxu0 0
    %474 = vmatprep.subr.bf16.mxu0 0
    %475 = vmatpush1.bf16.msra.mxu0 0
    %476 = vmatprep.subr.bf16.mxu0 0
    %477 = vmatpush1.bf16.msra.mxu0 0
    %478 = vmatprep.subr.bf16.mxu0 0
    %479 = vmatpush1.bf16.msra.mxu0 0
    %480 = vmatprep.subr.bf16.mxu0 0
    %481 = vmatpush1.bf16.msra.mxu0 0
    %482 = vmatprep.mubr.bf16.mxu0 0
    %483 = vmatmul.mubr.bf16.gmra.mrb[0].mxu0 %v448
    %v484 = vpop.f32.mrb[0].mxu0
    %v485 = vadd.f32 %v398, %v484
    %v486 = vpop.f32.mrb[0].mxu0
    %v487 = vadd.f32 %v402, %v486
    %v488 = vpop.f32.mrb[0].mxu0
    %v489 = vpop.f32.mrb[0].mxu0
    %490 = vdwg.mxu0
    %v491 = vxor.u32 %v485, 2147483648
    %v492 = vmul.f32 %v491, 1.442695
    %v493 = vpow.pop %v492
    %v494 = vadd.f32 %v493, 1.0
    %v495 = vrcp.pop %v494
    %v496 = vmul.f32 1.0, %v495
    %498 = vrot.lane.b32.xlu0 %v485, 32
    %v499 = vpop.permute.xlu0 %498
    %v501 = vmul.f32 %v496, %v499
    %503 = vrot.lane.b32.xlu0 %v501, 64
    %v504 = vpop.permute.xlu0 %503
    %v506 = vadd.f32 %v485, %v504
    %v507 = vtanh.pop %v506
    %v508 = vsub.f32 %v333, %v507
    %510 = vrot.lane.b32.xlu0 %v508, 96
    %v511 = vpop.permute.xlu0 %510
    %v513 = vmul.f32 %v496, %v511
    %515 = vrot.lane.b32.xlu0 %v513, 32
    %v516 = vpop.permute.xlu0 %515
    %v518 = vadd.f32 %v507, %v516
    %520 = vrot.lane.b32.xlu0 %v518, 64
    %v521 = vpop.permute.xlu0 %520
    %s523 = scalar_lea.vmem [#allocation8], 2
    %524 = vst.msk [vmem:[%s523] sm:$0x3] %vm338, %v521
    %v526 = vrot.slane %v487, 4
    %v528 = vadd.f32 %v151, %v526
    %v529 = vxor.u32 %v528, 2147483648
    %v530 = vmul.f32 %v529, 1.442695
    %v531 = vpow.pop %v530
    %v532 = vadd.f32 %v531, 1.0
    %v533 = vrcp.pop %v532
    %v534 = vmul.f32 1.0, %v533
    %535 = vrot.lane.b32.xlu0 %v526, 64
    %v536 = vpop.permute.xlu0 %535
    %v538 = vmul.f32 %v534, %v536
    %540 = vrot.lane.b32.xlu0 %v538, 64
    %v541 = vpop.permute.xlu0 %540
    %v543 = vadd.f32 %v151, %v541
    %v544 = vtanh.pop %v543
    %v546 = vrot.slane %v544, 2
    %v548 = vsub.f32 %v374, %v546
    %v550 = vrot.slane %v548, 6
    %551 = vrot.lane.b32.xlu0 %v550, 96
    %v552 = vpop.permute.xlu0 %551
    %v554 = vmul.f32 %v534, %v552
    %556 = vrot.lane.b32.xlu0 %v554, 32
    %v557 = vpop.permute.xlu0 %556
    %v559 = vadd.f32 %v544, %v557
    %561 = vrot.lane.b32.xlu0 %v559, 64
    %v562 = vpop.permute.xlu0 %561
    %v564 = vrot.slane %v518, 4
    %565 = vrot.lane.b32.xlu0 %v564, 96
    %v566 = vpop.permute.xlu0 %565
    %v568 = vsel %vm198, %v562, %v566
    %v569 = vpack.c.bf16 %v568, %v568
    %v570 = vld [vmem:[#allocation7] sm:$0xff]
    %v571 = vld [vmem:[#allocation7 + $0x8] sm:$0xff]
    %v572 = vld [vmem:[#allocation7 + $0x10] sm:$0xff]
    %v573 = vld [vmem:[#allocation7 + $0x18] sm:$0xff]
    %v574 = vld [vmem:[#allocation7 + $0x20] sm:$0xff]
    %v575 = vld [vmem:[#allocation7 + $0x28] sm:$0xff]
    %v576 = vld [vmem:[#allocation7 + $0x30] sm:$0xff]
    %v577 = vld [vmem:[#allocation7 + $0x38] sm:$0xff]
    %v578 = vld [vmem:[%s4] sm:$0x3]
    %v580 = vlaneseq
    %v581 = vshrl.u32 %v580, 7
    %v582 = vsub.s32 0, %v581
    %v583 = vrot.slane %v578, %v582
    %v584 = vlaneseq
    %v585 = vshrl.u32 %v584, 7
    %v586 = vsub.s32 1, %v585
    %v587 = vrot.slane %v578, %v586
    %v591 = vrot.slane %v569, 2
    %v600 = vunpack.c.l.b16 %v570
    %v601 = vunpack.c.h.b16 %v570
    %v602 = vunpack.c.l.b16 %v571
    %v603 = vunpack.c.h.b16 %v571
    %v604 = vunpack.c.l.b16 %v572
    %v605 = vunpack.c.h.b16 %v572
    %v606 = vunpack.c.l.b16 %v573
    %v607 = vunpack.c.h.b16 %v573
    %v608 = vunpack.c.l.b16 %v574
    %v609 = vunpack.c.h.b16 %v574
    %v610 = vunpack.c.l.b16 %v575
    %v611 = vunpack.c.h.b16 %v575
    %v612 = vunpack.c.l.b16 %v576
    %v613 = vunpack.c.h.b16 %v576
    %v614 = vunpack.c.l.b16 %v577
    %v615 = vunpack.c.h.b16 %v577
    %v616 = vpack.c.b16 %v602, %v600
    %v617 = vpack.c.b16 %v603, %v601
    %v618 = vpack.c.b16 %v606, %v604
    %v619 = vpack.c.b16 %v607, %v605
    %v620 = vpack.c.b16 %v610, %v608
    %v621 = vpack.c.b16 %v611, %v609
    %v622 = vpack.c.b16 %v614, %v612
    %v623 = vpack.c.b16 %v615, %v613
    %v633 = vsel %vm261, %v591, 0
    %635 = vmatprep.subr.bf16.mxu0 %v617
    %636 = vmatpush1.bf16.msra.mxu0 %v616
    %637 = vmatprep.subr.bf16.mxu0 %v619
    %638 = vmatpush1.bf16.msra.mxu0 %v618
    %639 = vmatprep.subr.bf16.mxu0 %v621
    %640 = vmatpush1.bf16.msra.mxu0 %v620
    %641 = vmatprep.subr.bf16.mxu0 %v623
    %642 = vmatpush1.bf16.msra.mxu0 %v622
    %643 = vmatprep.subr.bf16.mxu0 0
    %644 = vmatpush1.bf16.msra.mxu0 0
    %645 = vmatprep.subr.bf16.mxu0 0
    %646 = vmatpush1.bf16.msra.mxu0 0
    %647 = vmatprep.subr.bf16.mxu0 0
    %648 = vmatpush1.bf16.msra.mxu0 0
    %649 = vmatprep.subr.bf16.mxu0 0
    %650 = vmatpush1.bf16.msra.mxu0 0
    %651 = vmatprep.subr.bf16.mxu0 0
    %652 = vmatpush1.bf16.msra.mxu0 0
    %653 = vmatprep.subr.bf16.mxu0 0
    %654 = vmatpush1.bf16.msra.mxu0 0
    %655 = vmatprep.subr.bf16.mxu0 0
    %656 = vmatpush1.bf16.msra.mxu0 0
    %657 = vmatprep.subr.bf16.mxu0 0
    %658 = vmatpush1.bf16.msra.mxu0 0
    %659 = vmatprep.subr.bf16.mxu0 0
    %660 = vmatpush1.bf16.msra.mxu0 0
    %661 = vmatprep.subr.bf16.mxu0 0
    %662 = vmatpush1.bf16.msra.mxu0 0
    %663 = vmatprep.subr.bf16.mxu0 0
    %664 = vmatpush1.bf16.msra.mxu0 0
    %665 = vmatprep.subr.bf16.mxu0 0
    %666 = vmatpush1.bf16.msra.mxu0 0
    %667 = vmatprep.mubr.bf16.mxu0 0
    %668 = vmatmul.mubr.bf16.gmra.mrb[0].mxu0 %v633
    %v669 = vpop.f32.mrb[0].mxu0
    %v670 = vadd.f32 %v583, %v669
    %v671 = vpop.f32.mrb[0].mxu0
    %v672 = vadd.f32 %v587, %v671
    %v673 = vpop.f32.mrb[0].mxu0
    %v674 = vpop.f32.mrb[0].mxu0
    %675 = vdwg.mxu0
    %v676 = vxor.u32 %v670, 2147483648
    %v677 = vmul.f32 %v676, 1.442695
    %v678 = vpow.pop %v677
    %v679 = vadd.f32 %v678, 1.0
    %v680 = vrcp.pop %v679
    %v681 = vmul.f32 1.0, %v680
    %683 = vrot.lane.b32.xlu0 %v670, 32
    %v684 = vpop.permute.xlu0 %683
    %v686 = vmul.f32 %v681, %v684
    %688 = vrot.lane.b32.xlu0 %v686, 64
    %v689 = vpop.permute.xlu0 %688
    %v691 = vadd.f32 %v670, %v689
    %v692 = vtanh.pop %v691
    %v693 = vsub.f32 %v518, %v692
    %695 = vrot.lane.b32.xlu0 %v693, 96
    %v696 = vpop.permute.xlu0 %695
    %v698 = vmul.f32 %v681, %v696
    %700 = vrot.lane.b32.xlu0 %v698, 32
    %v701 = vpop.permute.xlu0 %700
    %v703 = vadd.f32 %v692, %v701
    %705 = vrot.lane.b32.xlu0 %v703, 64
    %v706 = vpop.permute.xlu0 %705
    %s708 = scalar_lea.vmem [#allocation8], 4
    %709 = vst.msk [vmem:[%s708] sm:$0x3] %vm338, %v706
    %v711 = vrot.slane %v672, 2
    %v713 = vadd.f32 %v151, %v711
    %v714 = vxor.u32 %v713, 2147483648
    %v715 = vmul.f32 %v714, 1.442695
    %v716 = vpow.pop %v715
    %v717 = vadd.f32 %v716, 1.0
    %v718 = vrcp.pop %v717
    %v719 = vmul.f32 1.0, %v718
    %720 = vrot.lane.b32.xlu0 %v711, 64
    %v721 = vpop.permute.xlu0 %720
    %v723 = vmul.f32 %v719, %v721
    %725 = vrot.lane.b32.xlu0 %v723, 64
    %v726 = vpop.permute.xlu0 %725
    %v728 = vadd.f32 %v151, %v726
    %v729 = vtanh.pop %v728
    %v731 = vrot.slane %v729, 2
    %v733 = vsub.f32 %v559, %v731
    %v735 = vrot.slane %v733, 6
    %736 = vrot.lane.b32.xlu0 %v735, 96
    %v737 = vpop.permute.xlu0 %736
    %v739 = vmul.f32 %v719, %v737
    %741 = vrot.lane.b32.xlu0 %v739, 32
    %v742 = vpop.permute.xlu0 %741
    %v744 = vadd.f32 %v729, %v742
    %746 = vrot.lane.b32.xlu0 %v744, 64
    %v747 = vpop.permute.xlu0 %746
    %v749 = vrot.slane %v703, 2
    %750 = vrot.lane.b32.xlu0 %v749, 96
    %v751 = vpop.permute.xlu0 %750
    %v753 = vsel %vm198, %v747, %v751
    %v754 = vpack.c.bf16 %v753, %v753
    %v755 = vld [vmem:[#allocation7] sm:$0xff]
    %v756 = vld [vmem:[#allocation7 + $0x8] sm:$0xff]
    %v757 = vld [vmem:[#allocation7 + $0x10] sm:$0xff]
    %v758 = vld [vmem:[#allocation7 + $0x18] sm:$0xff]
    %v759 = vld [vmem:[#allocation7 + $0x20] sm:$0xff]
    %v760 = vld [vmem:[#allocation7 + $0x28] sm:$0xff]
    %v761 = vld [vmem:[#allocation7 + $0x30] sm:$0xff]
    %v762 = vld [vmem:[#allocation7 + $0x38] sm:$0xff]
    %v763 = vld [vmem:[%s4] sm:$0x3]
    %v765 = vlaneseq
    %v766 = vshrl.u32 %v765, 7
    %v767 = vsub.s32 0, %v766
    %v768 = vrot.slane %v763, %v767
    %v769 = vlaneseq
    %v770 = vshrl.u32 %v769, 7
    %v771 = vsub.s32 1, %v770
    %v772 = vrot.slane %v763, %v771
    %v776 = vrot.slane %v754, 3
    %v785 = vunpack.c.l.b16 %v755
    %v786 = vunpack.c.h.b16 %v755
    %v787 = vunpack.c.l.b16 %v756
    %v788 = vunpack.c.h.b16 %v756
    %v789 = vunpack.c.l.b16 %v757
    %v790 = vunpack.c.h.b16 %v757
    %v791 = vunpack.c.l.b16 %v758
    %v792 = vunpack.c.h.b16 %v758
    %v793 = vunpack.c.l.b16 %v759
    %v794 = vunpack.c.h.b16 %v759
    %v795 = vunpack.c.l.b16 %v760
    %v796 = vunpack.c.h.b16 %v760
    %v797 = vunpack.c.l.b16 %v761
    %v798 = vunpack.c.h.b16 %v761
    %v799 = vunpack.c.l.b16 %v762
    %v800 = vunpack.c.h.b16 %v762
    %v801 = vpack.c.b16 %v787, %v785
    %v802 = vpack.c.b16 %v788, %v786
    %v803 = vpack.c.b16 %v791, %v789
    %v804 = vpack.c.b16 %v792, %v790
    %v805 = vpack.c.b16 %v795, %v793
    %v806 = vpack.c.b16 %v796, %v794
    %v807 = vpack.c.b16 %v799, %v797
    %v808 = vpack.c.b16 %v800, %v798
    %v818 = vsel %vm261, %v776, 0
    %820 = vmatprep.subr.bf16.mxu0 %v802
    %821 = vmatpush1.bf16.msra.mxu0 %v801
    %822 = vmatprep.subr.bf16.mxu0 %v804
    %823 = vmatpush1.bf16.msra.mxu0 %v803
    %824 = vmatprep.subr.bf16.mxu0 %v806
    %825 = vmatpush1.bf16.msra.mxu0 %v805
    %826 = vmatprep.subr.bf16.mxu0 %v808
    %827 = vmatpush1.bf16.msra.mxu0 %v807
    %828 = vmatprep.subr.bf16.mxu0 0
    %829 = vmatpush1.bf16.msra.mxu0 0
    %830 = vmatprep.subr.bf16.mxu0 0
    %831 = vmatpush1.bf16.msra.mxu0 0
    %832 = vmatprep.subr.bf16.mxu0 0
    %833 = vmatpush1.bf16.msra.mxu0 0
    %834 = vmatprep.subr.bf16.mxu0 0
    %835 = vmatpush1.bf16.msra.mxu0 0
    %836 = vmatprep.subr.bf16.mxu0 0
    %837 = vmatpush1.bf16.msra.mxu0 0
    %838 = vmatprep.subr.bf16.mxu0 0
    %839 = vmatpush1.bf16.msra.mxu0 0
    %840 = vmatprep.subr.bf16.mxu0 0
    %841 = vmatpush1.bf16.msra.mxu0 0
    %842 = vmatprep.subr.bf16.mxu0 0
    %843 = vmatpush1.bf16.msra.mxu0 0
    %844 = vmatprep.subr.bf16.mxu0 0
    %845 = vmatpush1.bf16.msra.mxu0 0
    %846 = vmatprep.subr.bf16.mxu0 0
    %847 = vmatpush1.bf16.msra.mxu0 0
    %848 = vmatprep.subr.bf16.mxu0 0
    %849 = vmatpush1.bf16.msra.mxu0 0
    %850 = vmatprep.subr.bf16.mxu0 0
    %851 = vmatpush1.bf16.msra.mxu0 0
    %852 = vmatprep.mubr.bf16.mxu0 0
    %853 = vmatmul.mubr.bf16.gmra.mrb[0].mxu0 %v818
    %v854 = vpop.f32.mrb[0].mxu0
    %v855 = vadd.f32 %v768, %v854
    %v856 = vpop.f32.mrb[0].mxu0
    %v857 = vadd.f32 %v772, %v856
    %v858 = vpop.f32.mrb[0].mxu0
    %v859 = vpop.f32.mrb[0].mxu0
    %860 = vdwg.mxu0
    %v861 = vxor.u32 %v855, 2147483648
    %v862 = vmul.f32 %v861, 1.442695
    %v863 = vpow.pop %v862
    %v864 = vadd.f32 %v863, 1.0
    %v865 = vrcp.pop %v864
    %v866 = vmul.f32 1.0, %v865
    %868 = vrot.lane.b32.xlu0 %v855, 32
    %v869 = vpop.permute.xlu0 %868
    %v871 = vmul.f32 %v866, %v869
    %873 = vrot.lane.b32.xlu0 %v871, 64
    %v874 = vpop.permute.xlu0 %873
    %v876 = vadd.f32 %v855, %v874
    %v877 = vtanh.pop %v876
    %v878 = vsub.f32 %v703, %v877
    %880 = vrot.lane.b32.xlu0 %v878, 96
    %v881 = vpop.permute.xlu0 %880
    %v883 = vmul.f32 %v866, %v881
    %885 = vrot.lane.b32.xlu0 %v883, 32
    %v886 = vpop.permute.xlu0 %885
    %v888 = vadd.f32 %v877, %v886
    %890 = vrot.lane.b32.xlu0 %v888, 64
    %v891 = vpop.permute.xlu0 %890
    %s893 = scalar_lea.vmem [#allocation8], 6
    %894 = vst.msk [vmem:[%s893] sm:$0x3] %vm338, %v891
    %v895 = vadd.f32 %v156, %v857
    %v896 = vxor.u32 %v895, 2147483648
    %v897 = vmul.f32 %v896, 1.442695
    %v898 = vpow.pop %v897
    %v899 = vadd.f32 %v898, 1.0
    %v900 = vrcp.pop %v899
    %v901 = vmul.f32 1.0, %v900
    %903 = vrot.lane.b32.xlu0 %v857, 64
    %v904 = vpop.permute.xlu0 %903
    %v906 = vmul.f32 %v901, %v904
    %908 = vrot.lane.b32.xlu0 %v906, 64
    %v909 = vpop.permute.xlu0 %908
    %v911 = vadd.f32 %v156, %v909
    %v912 = vtanh.pop %v911
    %v914 = vrot.slane %v912, 2
    %v916 = vsub.f32 %v744, %v914
    %v918 = vrot.slane %v916, 6
    %919 = vrot.lane.b32.xlu0 %v918, 96
    %v920 = vpop.permute.xlu0 %919
    %v922 = vmul.f32 %v901, %v920
    %924 = vrot.lane.b32.xlu0 %v922, 32
    %v925 = vpop.permute.xlu0 %924
    %v927 = vadd.f32 %v912, %v925
    %929 = vrot.lane.b32.xlu0 %v927, 64
    %v930 = vpop.permute.xlu0 %929
    %932 = vrot.lane.b32.xlu0 %v888, 96
    %v933 = vpop.permute.xlu0 %932
    %v935 = vsel %vm198, %v930, %v933
    %v936 = vpack.c.bf16 %v935, %v935
    %v937 = vld [vmem:[#allocation7] sm:$0xff]
    %v938 = vld [vmem:[#allocation7 + $0x8] sm:$0xff]
    %v939 = vld [vmem:[#allocation7 + $0x10] sm:$0xff]
    %v940 = vld [vmem:[#allocation7 + $0x18] sm:$0xff]
    %v941 = vld [vmem:[#allocation7 + $0x20] sm:$0xff]
    %v942 = vld [vmem:[#allocation7 + $0x28] sm:$0xff]
    %v943 = vld [vmem:[#allocation7 + $0x30] sm:$0xff]
    %v944 = vld [vmem:[#allocation7 + $0x38] sm:$0xff]
    %v945 = vld [vmem:[%s4] sm:$0x3]
    %v947 = vlaneseq
    %v948 = vshrl.u32 %v947, 7
    %v949 = vsub.s32 0, %v948
    %v950 = vrot.slane %v945, %v949
    %v951 = vlaneseq
    %v952 = vshrl.u32 %v951, 7
    %v953 = vsub.s32 1, %v952
    %v954 = vrot.slane %v945, %v953
    %v965 = vunpack.c.l.b16 %v937
    %v966 = vunpack.c.h.b16 %v937
    %v967 = vunpack.c.l.b16 %v938
    %v968 = vunpack.c.h.b16 %v938
    %v969 = vunpack.c.l.b16 %v939
    %v970 = vunpack.c.h.b16 %v939
    %v971 = vunpack.c.l.b16 %v940
    %v972 = vunpack.c.h.b16 %v940
    %v973 = vunpack.c.l.b16 %v941
    %v974 = vunpack.c.h.b16 %v941
    %v975 = vunpack.c.l.b16 %v942
    %v976 = vunpack.c.h.b16 %v942
    %v977 = vunpack.c.l.b16 %v943
    %v978 = vunpack.c.h.b16 %v943
    %v979 = vunpack.c.l.b16 %v944
    %v980 = vunpack.c.h.b16 %v944
    %v981 = vpack.c.b16 %v967, %v965
    %v982 = vpack.c.b16 %v968, %v966
    %v983 = vpack.c.b16 %v971, %v969
    %v984 = vpack.c.b16 %v972, %v970
    %v985 = vpack.c.b16 %v975, %v973
    %v986 = vpack.c.b16 %v976, %v974
    %v987 = vpack.c.b16 %v979, %v977
    %v988 = vpack.c.b16 %v980, %v978
    %v998 = vsel %vm261, %v936, 0
    %1000 = vmatprep.subr.bf16.mxu0 %v982
    %1001 = vmatpush1.bf16.msra.mxu0 %v981
    %1002 = vmatprep.subr.bf16.mxu0 %v984
    %1003 = vmatpush1.bf16.msra.mxu0 %v983
    %1004 = vmatprep.subr.bf16.mxu0 %v986
    %1005 = vmatpush1.bf16.msra.mxu0 %v985
    %1006 = vmatprep.subr.bf16.mxu0 %v988
    %1007 = vmatpush1.bf16.msra.mxu0 %v987
    %1008 = vmatprep.subr.bf16.mxu0 0
    %1009 = vmatpush1.bf16.msra.mxu0 0
    %1010 = vmatprep.subr.bf16.mxu0 0
    %1011 = vmatpush1.bf16.msra.mxu0 0
    %1012 = vmatprep.subr.bf16.mxu0 0
    %1013 = vmatpush1.bf16.msra.mxu0 0
    %1014 = vmatprep.subr.bf16.mxu0 0
    %1015 = vmatpush1.bf16.msra.mxu0 0
    %1016 = vmatprep.subr.bf16.mxu0 0
    %1017 = vmatpush1.bf16.msra.mxu0 0
    %1018 = vmatprep.subr.bf16.mxu0 0
    %1019 = vmatpush1.bf16.msra.mxu0 0
    %1020 = vmatprep.subr.bf16.mxu0 0
    %1021 = vmatpush1.bf16.msra.mxu0 0
    %1022 = vmatprep.subr.bf16.mxu0 0
    %1023 = vmatpush1.bf16.msra.mxu0 0
    %1024 = vmatprep.subr.bf16.mxu0 0
    %1025 = vmatpush1.bf16.msra.mxu0 0
    %1026 = vmatprep.subr.bf16.mxu0 0
    %1027 = vmatpush1.bf16.msra.mxu0 0
    %1028 = vmatprep.subr.bf16.mxu0 0
    %1029 = vmatpush1.bf16.msra.mxu0 0
    %1030 = vmatprep.subr.bf16.mxu0 0
    %1031 = vmatpush1.bf16.msra.mxu0 0
    %1032 = vmatprep.mubr.bf16.mxu0 0
    %1033 = vmatmul.mubr.bf16.gmra.mrb[0].mxu0 %v998
    %v1034 = vpop.f32.mrb[0].mxu0
    %v1035 = vadd.f32 %v950, %v1034
    %v1036 = vpop.f32.mrb[0].mxu0
    %v1037 = vadd.f32 %v954, %v1036
    %v1038 = vpop.f32.mrb[0].mxu0
    %v1039 = vpop.f32.mrb[0].mxu0
    %1040 = vdwg.mxu0
    %v1041 = vxor.u32 %v1035, 2147483648
    %v1042 = vmul.f32 %v1041, 1.442695
    %v1043 = vpow.pop %v1042
    %v1044 = vadd.f32 %v1043, 1.0
    %v1045 = vrcp.pop %v1044
    %v1046 = vmul.f32 1.0, %v1045
    %1048 = vrot.lane.b32.xlu0 %v1035, 32
    %v1049 = vpop.permute.xlu0 %1048
    %v1051 = vmul.f32 %v1046, %v1049
    %1053 = vrot.lane.b32.xlu0 %v1051, 64
    %v1054 = vpop.permute.xlu0 %1053
    %v1056 = vadd.f32 %v1035, %v1054
    %v1057 = vtanh.pop %v1056
    %v1058 = vsub.f32 %v888, %v1057
    %1060 = vrot.lane.b32.xlu0 %v1058, 96
    %v1061 = vpop.permute.xlu0 %1060
    %v1063 = vmul.f32 %v1046, %v1061
    %1065 = vrot.lane.b32.xlu0 %v1063, 32
    %v1066 = vpop.permute.xlu0 %1065
    %v1068 = vadd.f32 %v1057, %v1066
    %1070 = vrot.lane.b32.xlu0 %v1068, 64
    %v1071 = vpop.permute.xlu0 %1070
    %s1073 = scalar_lea.vmem [#allocation8], 8
    %1074 = vst.msk [vmem:[%s1073] sm:$0x3] %vm338, %v1071
    %v1076 = vrot.slane %v1037, 6
    %v1078 = vadd.f32 %v156, %v1076
    %v1079 = vxor.u32 %v1078, 2147483648
    %v1080 = vmul.f32 %v1079, 1.442695
    %v1081 = vpow.pop %v1080
    %v1082 = vadd.f32 %v1081, 1.0
    %v1083 = vrcp.pop %v1082
    %v1084 = vmul.f32 1.0, %v1083
    %1085 = vrot.lane.b32.xlu0 %v1076, 64
    %v1086 = vpop.permute.xlu0 %1085
    %v1088 = vmul.f32 %v1084, %v1086
    %1090 = vrot.lane.b32.xlu0 %v1088, 64
    %v1091 = vpop.permute.xlu0 %1090
    %v1093 = vadd.f32 %v156, %v1091
    %v1094 = vtanh.pop %v1093
    %v1096 = vrot.slane %v1094, 2
    %v1098 = vsub.f32 %v927, %v1096
    %v1100 = vrot.slane %v1098, 6
    %1101 = vrot.lane.b32.xlu0 %v1100, 96
    %v1102 = vpop.permute.xlu0 %1101
    %v1104 = vmul.f32 %v1084, %v1102
    %1106 = vrot.lane.b32.xlu0 %v1104, 32
    %v1107 = vpop.permute.xlu0 %1106
    %v1109 = vadd.f32 %v1094, %v1107
    %1111 = vrot.lane.b32.xlu0 %v1109, 64
    %v1112 = vpop.permute.xlu0 %1111
    %v1114 = vrot.slane %v1068, 6
    %1115 = vrot.lane.b32.xlu0 %v1114, 96
    %v1116 = vpop.permute.xlu0 %1115
    %v1118 = vsel %vm198, %v1112, %v1116
    %v1119 = vpack.c.bf16 %v1118, %v1118
    %v1120 = vld [vmem:[#allocation7] sm:$0xff]
    %v1121 = vld [vmem:[#allocation7 + $0x8] sm:$0xff]
    %v1122 = vld [vmem:[#allocation7 + $0x10] sm:$0xff]
    %v1123 = vld [vmem:[#allocation7 + $0x18] sm:$0xff]
    %v1124 = vld [vmem:[#allocation7 + $0x20] sm:$0xff]
    %v1125 = vld [vmem:[#allocation7 + $0x28] sm:$0xff]
    %v1126 = vld [vmem:[#allocation7 + $0x30] sm:$0xff]
    %v1127 = vld [vmem:[#allocation7 + $0x38] sm:$0xff]
    %v1128 = vld [vmem:[%s4] sm:$0x3]
    %v1130 = vlaneseq
    %v1131 = vshrl.u32 %v1130, 7
    %v1132 = vsub.s32 0, %v1131
    %v1133 = vrot.slane %v1128, %v1132
    %v1134 = vlaneseq
    %v1135 = vshrl.u32 %v1134, 7
    %v1136 = vsub.s32 1, %v1135
    %v1137 = vrot.slane %v1128, %v1136
    %v1141 = vrot.slane %v1119, 1
    %v1150 = vunpack.c.l.b16 %v1120
    %v1151 = vunpack.c.h.b16 %v1120
    %v1152 = vunpack.c.l.b16 %v1121
    %v1153 = vunpack.c.h.b16 %v1121
    %v1154 = vunpack.c.l.b16 %v1122
    %v1155 = vunpack.c.h.b16 %v1122
    %v1156 = vunpack.c.l.b16 %v1123
    %v1157 = vunpack.c.h.b16 %v1123
    %v1158 = vunpack.c.l.b16 %v1124
    %v1159 = vunpack.c.h.b16 %v1124
    %v1160 = vunpack.c.l.b16 %v1125
    %v1161 = vunpack.c.h.b16 %v1125
    %v1162 = vunpack.c.l.b16 %v1126
    %v1163 = vunpack.c.h.b16 %v1126
    %v1164 = vunpack.c.l.b16 %v1127
    %v1165 = vunpack.c.h.b16 %v1127
    %v1166 = vpack.c.b16 %v1152, %v1150
    %v1167 = vpack.c.b16 %v1153, %v1151
    %v1168 = vpack.c.b16 %v1156, %v1154
    %v1169 = vpack.c.b16 %v1157, %v1155
    %v1170 = vpack.c.b16 %v1160, %v1158
    %v1171 = vpack.c.b16 %v1161, %v1159
    %v1172 = vpack.c.b16 %v1164, %v1162
    %v1173 = vpack.c.b16 %v1165, %v1163
    %v1183 = vsel %vm261, %v1141, 0
    %1185 = vmatprep.subr.bf16.mxu0 %v1167
    %1186 = vmatpush1.bf16.msra.mxu0 %v1166
    %1187 = vmatprep.subr.bf16.mxu0 %v1169
    %1188 = vmatpush1.bf16.msra.mxu0 %v1168
    %1189 = vmatprep.subr.bf16.mxu0 %v1171
    %1190 = vmatpush1.bf16.msra.mxu0 %v1170
    %1191 = vmatprep.subr.bf16.mxu0 %v1173
    %1192 = vmatpush1.bf16.msra.mxu0 %v1172
    %1193 = vmatprep.subr.bf16.mxu0 0
    %1194 = vmatpush1.bf16.msra.mxu0 0
    %1195 = vmatprep.subr.bf16.mxu0 0
    %1196 = vmatpush1.bf16.msra.mxu0 0
    %1197 = vmatprep.subr.bf16.mxu0 0
    %1198 = vmatpush1.bf16.msra.mxu0 0
    %1199 = vmatprep.subr.bf16.mxu0 0
    %1200 = vmatpush1.bf16.msra.mxu0 0
    %1201 = vmatprep.subr.bf16.mxu0 0
    %1202 = vmatpush1.bf16.msra.mxu0 0
    %1203 = vmatprep.subr.bf16.mxu0 0
    %1204 = vmatpush1.bf16.msra.mxu0 0
    %1205 = vmatprep.subr.bf16.mxu0 0
    %1206 = vmatpush1.bf16.msra.mxu0 0
    %1207 = vmatprep.subr.bf16.mxu0 0
    %1208 = vmatpush1.bf16.msra.mxu0 0
    %1209 = vmatprep.subr.bf16.mxu0 0
    %1210 = vmatpush1.bf16.msra.mxu0 0
    %1211 = vmatprep.subr.bf16.mxu0 0
    %1212 = vmatpush1.bf16.msra.mxu0 0
    %1213 = vmatprep.subr.bf16.mxu0 0
    %1214 = vmatpush1.bf16.msra.mxu0 0
    %1215 = vmatprep.subr.bf16.mxu0 0
    %1216 = vmatpush1.bf16.msra.mxu0 0
    %1217 = vmatprep.mubr.bf16.mxu0 0
    %1218 = vmatmul.mubr.bf16.gmra.mrb[0].mxu0 %v1183
    %v1219 = vpop.f32.mrb[0].mxu0
    %v1220 = vadd.f32 %v1133, %v1219
    %v1221 = vpop.f32.mrb[0].mxu0
    %v1222 = vadd.f32 %v1137, %v1221
    %v1223 = vpop.f32.mrb[0].mxu0
    %v1224 = vpop.f32.mrb[0].mxu0
    %1225 = vdwg.mxu0
    %v1226 = vxor.u32 %v1220, 2147483648
    %v1227 = vmul.f32 %v1226, 1.442695
    %v1228 = vpow.pop %v1227
    %v1229 = vadd.f32 %v1228, 1.0
    %v1230 = vrcp.pop %v1229
    %v1231 = vmul.f32 1.0, %v1230
    %1233 = vrot.lane.b32.xlu0 %v1220, 32
    %v1234 = vpop.permute.xlu0 %1233
    %v1236 = vmul.f32 %v1231, %v1234
    %1238 = vrot.lane.b32.xlu0 %v1236, 64
    %v1239 = vpop.permute.xlu0 %1238
    %v1241 = vadd.f32 %v1220, %v1239
    %v1242 = vtanh.pop %v1241
    %v1243 = vsub.f32 %v1068, %v1242
    %1245 = vrot.lane.b32.xlu0 %v1243, 96
    %v1246 = vpop.permute.xlu0 %1245
    %v1248 = vmul.f32 %v1231, %v1246
    %1250 = vrot.lane.b32.xlu0 %v1248, 32
    %v1251 = vpop.permute.xlu0 %1250
    %v1253 = vadd.f32 %v1242, %v1251
    %1255 = vrot.lane.b32.xlu0 %v1253, 64
    %v1256 = vpop.permute.xlu0 %1255
    %s1258 = scalar_lea.vmem [#allocation8], 10
    %1259 = vst.msk [vmem:[%s1258] sm:$0x3] %vm338, %v1256
    %v1261 = vrot.slane %v1222, 4
    %v1263 = vadd.f32 %v156, %v1261
    %v1264 = vxor.u32 %v1263, 2147483648
    %v1265 = vmul.f32 %v1264, 1.442695
    %v1266 = vpow.pop %v1265
    %v1267 = vadd.f32 %v1266, 1.0
    %v1268 = vrcp.pop %v1267
    %v1269 = vmul.f32 1.0, %v1268
    %1270 = vrot.lane.b32.xlu0 %v1261, 64
    %v1271 = vpop.permute.xlu0 %1270
    %v1273 = vmul.f32 %v1269, %v1271
    %1275 = vrot.lane.b32.xlu0 %v1273, 64
    %v1276 = vpop.permute.xlu0 %1275
    %v1278 = vadd.f32 %v156, %v1276
    %v1279 = vtanh.pop %v1278
    %v1281 = vrot.slane %v1279, 2
    %v1283 = vsub.f32 %v1109, %v1281
    %v1285 = vrot.slane %v1283, 6
    %1286 = vrot.lane.b32.xlu0 %v1285, 96
    %v1287 = vpop.permute.xlu0 %1286
    %v1289 = vmul.f32 %v1269, %v1287
    %1291 = vrot.lane.b32.xlu0 %v1289, 32
    %v1292 = vpop.permute.xlu0 %1291
    %v1294 = vadd.f32 %v1279, %v1292
    %1296 = vrot.lane.b32.xlu0 %v1294, 64
    %v1297 = vpop.permute.xlu0 %1296
    %v1299 = vrot.slane %v1253, 4
    %1300 = vrot.lane.b32.xlu0 %v1299, 96
    %v1301 = vpop.permute.xlu0 %1300
    %v1303 = vsel %vm198, %v1297, %v1301
    %v1304 = vpack.c.bf16 %v1303, %v1303
    %v1305 = vld [vmem:[#allocation7] sm:$0xff]
    %v1306 = vld [vmem:[#allocation7 + $0x8] sm:$0xff]
    %v1307 = vld [vmem:[#allocation7 + $0x10] sm:$0xff]
    %v1308 = vld [vmem:[#allocation7 + $0x18] sm:$0xff]
    %v1309 = vld [vmem:[#allocation7 + $0x20] sm:$0xff]
    %v1310 = vld [vmem:[#allocation7 + $0x28] sm:$0xff]
    %v1311 = vld [vmem:[#allocation7 + $0x30] sm:$0xff]
    %v1312 = vld [vmem:[#allocation7 + $0x38] sm:$0xff]
    %v1313 = vld [vmem:[%s4] sm:$0x3]
    %v1315 = vlaneseq
    %v1316 = vshrl.u32 %v1315, 7
    %v1317 = vsub.s32 0, %v1316
    %v1318 = vrot.slane %v1313, %v1317
    %v1319 = vlaneseq
    %v1320 = vshrl.u32 %v1319, 7
    %v1321 = vsub.s32 1, %v1320
    %v1322 = vrot.slane %v1313, %v1321
    %v1326 = vrot.slane %v1304, 2
    %v1335 = vunpack.c.l.b16 %v1305
    %v1336 = vunpack.c.h.b16 %v1305
    %v1337 = vunpack.c.l.b16 %v1306
    %v1338 = vunpack.c.h.b16 %v1306
    %v1339 = vunpack.c.l.b16 %v1307
    %v1340 = vunpack.c.h.b16 %v1307
    %v1341 = vunpack.c.l.b16 %v1308
    %v1342 = vunpack.c.h.b16 %v1308
    %v1343 = vunpack.c.l.b16 %v1309
    %v1344 = vunpack.c.h.b16 %v1309
    %v1345 = vunpack.c.l.b16 %v1310
    %v1346 = vunpack.c.h.b16 %v1310
    %v1347 = vunpack.c.l.b16 %v1311
    %v1348 = vunpack.c.h.b16 %v1311
    %v1349 = vunpack.c.l.b16 %v1312
    %v1350 = vunpack.c.h.b16 %v1312
    %v1351 = vpack.c.b16 %v1337, %v1335
    %v1352 = vpack.c.b16 %v1338, %v1336
    %v1353 = vpack.c.b16 %v1341, %v1339
    %v1354 = vpack.c.b16 %v1342, %v1340
    %v1355 = vpack.c.b16 %v1345, %v1343
    %v1356 = vpack.c.b16 %v1346, %v1344
    %v1357 = vpack.c.b16 %v1349, %v1347
    %v1358 = vpack.c.b16 %v1350, %v1348
    %v1368 = vsel %vm261, %v1326, 0
    %1370 = vmatprep.subr.bf16.mxu0 %v1352
    %1371 = vmatpush1.bf16.msra.mxu0 %v1351
    %1372 = vmatprep.subr.bf16.mxu0 %v1354
    %1373 = vmatpush1.bf16.msra.mxu0 %v1353
    %1374 = vmatprep.subr.bf16.mxu0 %v1356
    %1375 = vmatpush1.bf16.msra.mxu0 %v1355
    %1376 = vmatprep.subr.bf16.mxu0 %v1358
    %1377 = vmatpush1.bf16.msra.mxu0 %v1357
    %1378 = vmatprep.subr.bf16.mxu0 0
    %1379 = vmatpush1.bf16.msra.mxu0 0
    %1380 = vmatprep.subr.bf16.mxu0 0
    %1381 = vmatpush1.bf16.msra.mxu0 0
    %1382 = vmatprep.subr.bf16.mxu0 0
    %1383 = vmatpush1.bf16.msra.mxu0 0
    %1384 = vmatprep.subr.bf16.mxu0 0
    %1385 = vmatpush1.bf16.msra.mxu0 0
    %1386 = vmatprep.subr.bf16.mxu0 0
    %1387 = vmatpush1.bf16.msra.mxu0 0
    %1388 = vmatprep.subr.bf16.mxu0 0
    %1389 = vmatpush1.bf16.msra.mxu0 0
    %1390 = vmatprep.subr.bf16.mxu0 0
    %1391 = vmatpush1.bf16.msra.mxu0 0
    %1392 = vmatprep.subr.bf16.mxu0 0
    %1393 = vmatpush1.bf16.msra.mxu0 0
    %1394 = vmatprep.subr.bf16.mxu0 0
    %1395 = vmatpush1.bf16.msra.mxu0 0
    %1396 = vmatprep.subr.bf16.mxu0 0
    %1397 = vmatpush1.bf16.msra.mxu0 0
    %1398 = vmatprep.subr.bf16.mxu0 0
    %1399 = vmatpush1.bf16.msra.mxu0 0
    %1400 = vmatprep.subr.bf16.mxu0 0
    %1401 = vmatpush1.bf16.msra.mxu0 0
    %1402 = vmatprep.mubr.bf16.mxu0 0
    %1403 = vmatmul.mubr.bf16.gmra.mrb[0].mxu0 %v1368
    %v1404 = vpop.f32.mrb[0].mxu0
    %v1405 = vadd.f32 %v1318, %v1404
    %v1406 = vpop.f32.mrb[0].mxu0
    %v1407 = vadd.f32 %v1322, %v1406
    %v1408 = vpop.f32.mrb[0].mxu0
    %v1409 = vpop.f32.mrb[0].mxu0
    %1410 = vdwg.mxu0
    %v1411 = vxor.u32 %v1405, 2147483648
    %v1412 = vmul.f32 %v1411, 1.442695
    %v1413 = vpow.pop %v1412
    %v1414 = vadd.f32 %v1413, 1.0
    %v1415 = vrcp.pop %v1414
    %v1416 = vmul.f32 1.0, %v1415
    %1418 = vrot.lane.b32.xlu0 %v1405, 32
    %v1419 = vpop.permute.xlu0 %1418
    %v1421 = vmul.f32 %v1416, %v1419
    %1423 = vrot.lane.b32.xlu0 %v1421, 64
    %v1424 = vpop.permute.xlu0 %1423
    %v1426 = vadd.f32 %v1405, %v1424
    %v1427 = vtanh.pop %v1426
    %v1428 = vsub.f32 %v1253, %v1427
    %1430 = vrot.lane.b32.xlu0 %v1428, 96
    %v1431 = vpop.permute.xlu0 %1430
    %v1433 = vmul.f32 %v1416, %v1431
    %1435 = vrot.lane.b32.xlu0 %v1433, 32
    %v1436 = vpop.permute.xlu0 %1435
    %v1438 = vadd.f32 %v1427, %v1436
    %1440 = vrot.lane.b32.xlu0 %v1438, 64
    %v1441 = vpop.permute.xlu0 %1440
    %s1443 = scalar_lea.vmem [#allocation8], 12
    %1444 = vst.msk [vmem:[%s1443] sm:$0x3] %vm338, %v1441
    %v1446 = vrot.slane %v1407, 2
    %v1448 = vadd.f32 %v156, %v1446
    %v1449 = vxor.u32 %v1448, 2147483648
    %v1450 = vmul.f32 %v1449, 1.442695
    %v1451 = vpow.pop %v1450
    %v1452 = vadd.f32 %v1451, 1.0
    %v1453 = vrcp.pop %v1452
    %v1454 = vmul.f32 1.0, %v1453
    %1455 = vrot.lane.b32.xlu0 %v1446, 64
    %v1456 = vpop.permute.xlu0 %1455
    %v1458 = vmul.f32 %v1454, %v1456
    %1460 = vrot.lane.b32.xlu0 %v1458, 64
    %v1461 = vpop.permute.xlu0 %1460
    %v1463 = vadd.f32 %v156, %v1461
    %v1464 = vtanh.pop %v1463
    %v1466 = vrot.slane %v1464, 2
    %v1468 = vsub.f32 %v1294, %v1466
    %v1470 = vrot.slane %v1468, 6
    %1471 = vrot.lane.b32.xlu0 %v1470, 96
    %v1472 = vpop.permute.xlu0 %1471
    %v1474 = vmul.f32 %v1454, %v1472
    %1476 = vrot.lane.b32.xlu0 %v1474, 32
    %v1477 = vpop.permute.xlu0 %1476
    %v1479 = vadd.f32 %v1464, %v1477
    %1481 = vrot.lane.b32.xlu0 %v1479, 64
    %v1482 = vpop.permute.xlu0 %1481
    %v1484 = vrot.slane %v1438, 2
    %1485 = vrot.lane.b32.xlu0 %v1484, 96
    %v1486 = vpop.permute.xlu0 %1485
    %v1488 = vsel %vm198, %v1482, %v1486
    %v1489 = vpack.c.bf16 %v1488, %v1488
    %v1490 = vld [vmem:[#allocation7] sm:$0xf]
    %v1491 = vld [vmem:[#allocation7 + $0x8] sm:$0xf]
    %v1492 = vld [vmem:[#allocation7 + $0x10] sm:$0xf]
    %v1493 = vld [vmem:[#allocation7 + $0x18] sm:$0xf]
    %v1494 = vld [vmem:[#allocation7 + $0x20] sm:$0xf]
    %v1495 = vld [vmem:[#allocation7 + $0x28] sm:$0xf]
    %v1496 = vld [vmem:[#allocation7 + $0x30] sm:$0xf]
    %v1497 = vld [vmem:[#allocation7 + $0x38] sm:$0xf]
    %v1498 = vld [vmem:[%s4] sm:$0x1]
    %v1500 = vlaneseq
    %v1501 = vshrl.u32 %v1500, 7
    %v1502 = vsub.s32 0, %v1501
    %v1503 = vrot.slane %v1498, %v1502
    %v1506 = vrot.slane %v1489, 3
    %v1515 = vunpack.c.l.b16 %v1490
    %v1516 = vunpack.c.l.b16 %v1491
    %v1517 = vunpack.c.l.b16 %v1492
    %v1518 = vunpack.c.l.b16 %v1493
    %v1519 = vunpack.c.l.b16 %v1494
    %v1520 = vunpack.c.l.b16 %v1495
    %v1521 = vunpack.c.l.b16 %v1496
    %v1522 = vunpack.c.l.b16 %v1497
    %v1523 = vpack.c.b16 %v1516, %v1515
    %v1524 = vpack.c.b16 %v1518, %v1517
    %v1525 = vpack.c.b16 %v1520, %v1519
    %v1526 = vpack.c.b16 %v1522, %v1521
    %v1532 = vsel %vm261, %v1506, 0
    %1534 = vmatprep.subr.bf16.mxu0 0
    %1535 = vmatpush1.bf16.msra.mxu0 %v1523
    %1536 = vmatprep.subr.bf16.mxu0 0
    %1537 = vmatpush1.bf16.msra.mxu0 %v1524
    %1538 = vmatprep.subr.bf16.mxu0 0
    %1539 = vmatpush1.bf16.msra.mxu0 %v1525
    %1540 = vmatprep.subr.bf16.mxu0 0
    %1541 = vmatpush1.bf16.msra.mxu0 %v1526
    %1542 = vmatprep.subr.bf16.mxu0 0
    %1543 = vmatpush1.bf16.msra.mxu0 0
    %1544 = vmatprep.subr.bf16.mxu0 0
    %1545 = vmatpush1.bf16.msra.mxu0 0
    %1546 = vmatprep.subr.bf16.mxu0 0
    %1547 = vmatpush1.bf16.msra.mxu0 0
    %1548 = vmatprep.subr.bf16.mxu0 0
    %1549 = vmatpush1.bf16.msra.mxu0 0
    %1550 = vmatprep.subr.bf16.mxu0 0
    %1551 = vmatpush1.bf16.msra.mxu0 0
    %1552 = vmatprep.subr.bf16.mxu0 0
    %1553 = vmatpush1.bf16.msra.mxu0 0
    %1554 = vmatprep.subr.bf16.mxu0 0
    %1555 = vmatpush1.bf16.msra.mxu0 0
    %1556 = vmatprep.subr.bf16.mxu0 0
    %1557 = vmatpush1.bf16.msra.mxu0 0
    %1558 = vmatprep.subr.bf16.mxu0 0
    %1559 = vmatpush1.bf16.msra.mxu0 0
    %1560 = vmatprep.subr.bf16.mxu0 0
    %1561 = vmatpush1.bf16.msra.mxu0 0
    %1562 = vmatprep.subr.bf16.mxu0 0
    %1563 = vmatpush1.bf16.msra.mxu0 0
    %1564 = vmatprep.subr.bf16.mxu0 0
    %1565 = vmatpush1.bf16.msra.mxu0 0
    %1566 = vmatprep.mubr.bf16.mxu0 0
    %1567 = vmatmul.mubr.bf16.gmra.mrb[0].mxu0 %v1532
    %v1568 = vpop.f32.mrb[0].mxu0
    %v1569 = vadd.f32 %v1503, %v1568
    %v1570 = vpop.f32.mrb[0].mxu0
    %v1571 = vpop.f32.mrb[0].mxu0
    %v1572 = vpop.f32.mrb[0].mxu0
    %1573 = vdwg.mxu0
    %v1574 = vxor.u32 %v1569, 2147483648
    %v1575 = vmul.f32 %v1574, 1.442695
    %v1576 = vpow.pop %v1575
    %v1577 = vadd.f32 %v1576, 1.0
    %v1578 = vrcp.pop %v1577
    %v1579 = vmul.f32 1.0, %v1578
    %1581 = vrot.lane.b32.xlu0 %v1569, 32
    %v1582 = vpop.permute.xlu0 %1581
    %v1584 = vmul.f32 %v1579, %v1582
    %1586 = vrot.lane.b32.xlu0 %v1584, 64
    %v1587 = vpop.permute.xlu0 %1586
    %v1589 = vadd.f32 %v1569, %v1587
    %v1590 = vtanh.pop %v1589
    %v1591 = vsub.f32 %v1438, %v1590
    %1593 = vrot.lane.b32.xlu0 %v1591, 96
    %v1594 = vpop.permute.xlu0 %1593
    %v1596 = vmul.f32 %v1579, %v1594
    %1598 = vrot.lane.b32.xlu0 %v1596, 32
    %v1599 = vpop.permute.xlu0 %1598
    %v1601 = vadd.f32 %v1590, %v1599
    %1603 = vrot.lane.b32.xlu0 %v1601, 64
    %v1604 = vpop.permute.xlu0 %1603
    %s1606 = scalar_lea.vmem [#allocation8], 14
    %1607 = vst.msk [vmem:[%s1606] sm:$0x3] %vm338, %v1604
    %vm1608 = vcmask 261126
    %1609 = vst.msk [vmem:[#allocation9 - $0x6] sm:$0xc0] %vm1608, %v1482
    %s1610 = scalar_lea.vmem [#allocation9], 2
    %1611 = vst.msk [vmem:[%s1610] sm:$0x3] %vm338, %v1604
    // Predicated region
    $region34: #{tpu_custom_call.1} parent=1 // pred_check
      _
    $region35: #{tpu_custom_call.1} parent=1 // pred_check_branch
      %1613 = sbr.rel (0) target = $region37
    $region36: #{tpu_custom_call.1} parent=1 // pred_region
      %s1615 = ssub.s32 256, 256
      %1616 = vsyncadd [#allocation4], %s1615
      %s1617 = sshll.u32 [#allocation8], 4
      %s1618 = int_to_ptr.vmem [resolvable:$true] %s1617
      %1623 = dma.vmem_to_hbm [thread:$0]  %s1618, 256, %s5, [#allocation4], 32, 32, 2
    $region37: #{tpu_custom_call.1} parent=1 // pred_fallthru
      _
    // Predicated region
    $region38: #{tpu_custom_call.1} parent=1 // pred_check
      _
    $region39: #{tpu_custom_call.1} parent=1 // pred_check_branch
      %1625 = sbr.rel (0) target = $region41
    $region40: #{tpu_custom_call.1} parent=1 // pred_region
      %s1627 = ssub.s32 64, 64
      %1628 = vsyncadd [#allocation10], %s1627
      %s1629 = sshll.u32 [#allocation9], 4
      %s1630 = int_to_ptr.vmem [resolvable:$true] %s1629
      %1635 = dma.vmem_to_hbm [thread:$0]  %s1630, 64, %s6, [#allocation10], 32, 32, 2
    $region41: #{tpu_custom_call.1} parent=1 // pred_fallthru
      _
    // Predicated region
    $region42: #{tpu_custom_call.1} parent=1 // pred_check
      _
    $region43: #{tpu_custom_call.1} parent=1 // pred_check_branch
      %1637 = sbr.rel (0) target = $region45
    $region44: #{tpu_custom_call.1} parent=1 // pred_region
      %1638 = dma.done [#allocation4], 256
    $region45: #{tpu_custom_call.1} parent=1 // pred_fallthru
      _
    // Predicated region
    $region46: #{tpu_custom_call.1} parent=1 // pred_check
      _
    $region47: #{tpu_custom_call.1} parent=1 // pred_check_branch
      %1640 = sbr.rel (0) target = $region49
    $region48: #{tpu_custom_call.1} parent=1 // pred_region
      %1641 = dma.done [#allocation10], 64
    $region49: #{tpu_custom_call.1} parent=1 // pred_fallthru
      _
    %1642 = vsyncpa [#allocation3], 1
    %1643 = vsyncpa [#allocation6], 1
    %1644 = vsyncpa [#allocation4], 1
    %1645 = vsyncpa [#allocation10], 1

</llo_original>
